<compile_context>
chip_gen: v5e
topology: v5e:2x2
jax: 0.10.0
libtpu: 0.0.40
codegen_flags: <defaults>
</compile_context>

<pallas_src>
import functools
import numpy as np
import jax
import jax.numpy as jnp
from jax import lax
from jax.experimental import pallas as pl
from jax.experimental.pallas import tpu as pltpu

EPS = 1e-12


def _int_pow_bits(d, exponent, max_exp):
    """d**exponent for an elementwise integer-valued float exponent in [0, max_exp].

    Square-and-multiply over the exponent bits: ~log2(max_exp) muls + selects on the VPU
    (no log/exp -> no EUP pressure, no 0**0 / log(0) NaN hazard)."""
    if max_exp <= 0:
        return jnp.ones_like(d)
    e_int = exponent.astype(jnp.int32)
    out = jnp.ones_like(d)
    d_pow = d                                  # d^(2^k)
    k = 0
    while (1 << k) <= max_exp:
        bit_set = ((e_int >> k) & 1) == 1
        out = jnp.where(bit_set, out * d_pow, out)
        k += 1
        if (1 << k) <= max_exp:
            d_pow = d_pow * d_pow
    return out


def qdf_kernel(dist_ref, qn_ref, zeta_ref, coef_ref, nelec_ref, vn_ref,
               w_pre_ref, b_pre_ref, w_func_ref, b_func_ref,
               w_prop_ref, b_prop_ref,
               e_ref, mo_ref, dens_ref,
               h_scratch,
               *, dim, dim_pad, layer_functional, operation, block_b, n_fields,
               n_output, q_max, mxu_bf16):
    G = n_fields
    NO = n_output
    Dp = dim_pad
    inv_dim = 1.0 / float(dim)                 # the REAL dim (padded columns stay exactly 0)
    mm_dt = jnp.bfloat16 if mxu_bf16 else jnp.float32

    # ---------------- stage 1: LCAO, fully vectorized over the molecule block ----------------
    d = dist_ref[...]                          # (BB, G, A)
    q = qn_ref[...]                            # (BB, 1, A)
    z = zeta_ref[...]                          # (BB, 1, A)
    coef = coef_ref[...]                       # (BB, A, Dp)
    ne = nelec_ref[...]                        # (BB, 1, 1)

    d2 = d * d
    z2 = z * z
    # one exponential per element, shared by the GTO and its Laplacian
    expterm = jnp.exp(-z2 * d2)
    # d^(q-1) via square-and-multiply; d^(q-3) = d^(q-1) / d^2 (exact for integer q)
    pw_qm1 = _int_pow_bits(d, q - 1.0, q_max - 1)

    # basis_matrix(laplace=False): column-normalized GTOs
    gto = pw_qm1 * expterm                                                    # (BB, G, A)
    inv_denom_g = lax.rsqrt(
        jnp.maximum(jnp.sum(gto * gto, axis=1, keepdims=True), EPS * EPS))    # (BB, 1, A)
    n_gto = gto * inv_denom_g

    # basis_matrix(laplace=True): same column normalizer as the plain GTO
    poly = (4.0 * z2 * z2 * d2 * d2
            - 2.0 * z2 * (2.0 * q + 1.0) * d2
            + q * (q - 1.0))
    # floor on d2 guards grid points coinciding with an atom centre (reference would NaN)
    inv_d2 = pl.reciprocal(jnp.maximum(d2, 1e-24), approx=True)
    l_gto = (pw_qm1 * inv_d2) * expterm * poly * inv_denom_g                  # (BB, G, A)

    # F.normalize(coefficient(AOs), 2, dim=0)
    inv_denom_c = lax.rsqrt(
        jnp.maximum(jnp.sum(coef * coef, axis=1, keepdims=True), EPS * EPS))  # (BB, 1, Dp)
    c_norm = coef * inv_denom_c

    # molecular orbitals: batched MXU matmuls (native 'bga,bad->bgd' pattern, f32 accumulate)
    mo_raw = jnp.einsum('bga,bad->bgd', n_gto.astype(mm_dt), c_norm.astype(mm_dt),
                        preferred_element_type=jnp.float32)                   # (BB, G, Dp)
    l_mo_raw = jnp.einsum('bga,bad->bgd', l_gto.astype(mm_dt), c_norm.astype(mm_dt),
                          preferred_element_type=jnp.float32)                 # (BB, G, Dp)

    inv_denom_mo = lax.rsqrt(
        jnp.maximum(jnp.sum(mo_raw * mo_raw, axis=1, keepdims=True), EPS * EPS))  # (BB, 1, Dp)
    scale2 = ne * (inv_denom_mo * inv_denom_mo) * inv_dim  # (BB,1,Dp) == (N_elec/dim)/denom^2
    mo = mo_raw * jnp.sqrt(scale2)             # == sqrt(N_elec/dim) * mo_raw / denom_mo
    mo_ref[...] = mo.astype(mo_ref.dtype)

    mo2 = mo * mo
    dens_col = jnp.sum(mo2, axis=2, keepdims=True)            # (BB, G, 1) for the functional
    dens_lane = jnp.sum(mo2, axis=2)                           # (BB, G) lane-dense for store/E_n
    dens_ref[...] = dens_lane[:, None, :].astype(dens_ref.dtype)

    # E_n = sum(V_n * density); E_k = 0.5 * sum(mo * l_mo) via per-column traces
    vn = vn_ref[...]                                                          # (BB, 1, G)
    e_n = jnp.sum(vn[:, 0, :] * dens_lane, axis=1, keepdims=True)             # (BB, 1)
    trace = jnp.sum(mo_raw * l_mo_raw, axis=1)                                # (BB, Dp)
    e_k = 0.5 * jnp.sum(trace * scale2[:, 0, :], axis=1, keepdims=True)       # (BB, 1)

    # ---------------- stage 2: DNN functional, fused across the whole block -------------------
    w_pre = w_pre_ref[...]                     # (1, Dp) hoisted loads (no per-molecule repeats)
    b_pre = b_pre_ref[...]                     # (1, Dp)
    h_scratch[...] = (dens_col * w_pre + b_pre).reshape(block_b * G, Dp)
    for l in range(layer_functional):
        hv = h_scratch[...]
        h_scratch[...] = jnp.maximum(
            jnp.dot(hv.astype(mm_dt), w_func_ref[l].astype(mm_dt),
                    preferred_element_type=jnp.float32) + b_func_ref[l],
            0.0)

    # ---------------- stage 3: pooling, property head, energy combine (batched) ---------------
    pooled = jnp.sum(h_scratch[...].reshape(block_b, G, Dp), axis=1)          # (BB, Dp)
    if operation == "mean":
        pooled = pooled * (1.0 / float(G))
    e_xch = jnp.dot(pooled.astype(mm_dt), w_prop_ref[...].astype(mm_dt),
                    preferred_element_type=jnp.float32) + b_prop_ref[...]     # (BB, NO)
    e_tot = e_xch + e_n - e_k                                                 # (BB, NO)
    # packed output row: [E_, E_xcH]
    e_ref[:, :, 0:NO] = e_tot[:, None, :]
    e_ref[:, :, NO:2 * NO] = e_xch[:, None, :]


def _ceil_to(x, m):
    return -(-int(x) // m) * m


def _tile_bytes(shape, itemsize=4):
    """VMEM bytes for one buffer of `shape`, including (8, 128) tile padding."""
    s = [int(v) for v in shape]
    if len(s) >= 1:
        s[-1] = _ceil_to(s[-1], 128)
    if len(s) >= 2:
        s[-2] = _ceil_to(s[-2], 8)
    n = 1
    for v in s:
        n *= v
    return n * itemsize


def _block_vmem_bytes(bb, G, A, Dp, NO, L):
    io_blocks = [(bb, G, A), (bb, 1, A), (bb, 1, A), (bb, A, Dp), (bb, 1, 1), (bb, 1, G),
                 (1, Dp), (1, Dp), (L, Dp, Dp), (L, 1, Dp), (Dp, NO), (1, NO),
                 (bb, 1, 2 * NO), (bb, G, Dp), (bb, 1, G)]
    total = 2 * sum(_tile_bytes(s) for s in io_blocks)        # double-buffered in/out tiles
    total += _tile_bytes((bb * G, Dp))                        # functional scratch
    return total


def _pick_block_b(B, G, A, Dp, NO, L, vmem_budget):
    """Smallest divisor of B giving >= 128 fused-matmul rows and >= 2 grid steps under the
    VMEM budget; the lane-dense (B,1,G)/(B,1,2*NO) layouts free block_b from any
    multiple-of-8 rule."""
    divisors = [d for d in range(1, B + 1) if B % d == 0]
    fitting = [d for d in divisors if _block_vmem_bytes(d, G, A, Dp, NO, L) <= vmem_budget]
    if not fitting:
        return 1
    for d in fitting:
        if d * G >= 128 and B // d >= 2:
            return d
    for d in fitting:
        if d * G >= 128:
            return d
    two_step = [d for d in fitting if B // d >= 2]
    if two_step:
        return two_step[-1]
    return fitting[-1]


def qdf_forward(dist, qn, zeta, coef, nelec, vn,
                w_pre, b_pre, w_func, b_func, w_prop, b_prop,
                *, operation="sum", q_max=8, block_b=None, mxu_bf16=False):
    B, G, A = dist.shape
    D = coef.shape[-1]
    L = w_func.shape[0]
    NO = w_prop.shape[-1]
    Dp = max(128, _ceil_to(D, 128))            # lane-dense hidden width

    # _int_pow_bits saturates at d^(q_max-1); check when the data is concrete.
    try:
        assert int(jax.device_get(jnp.max(qn))) <= q_max, "quantum number exceeds q_max"
    except (jax.errors.ConcretizationTypeError, jax.errors.TracerArrayConversionError):
        pass  # under tracing the caller must guarantee max(qn) <= q_max

    # zero-pad the hidden dimension (exact: padded columns are identically zero end to end)
    pad_d = Dp - D
    coef_p = jnp.pad(coef, ((0, 0), (0, 0), (0, pad_d)))
    w_pre_p = jnp.pad(w_pre, ((0, 0), (0, pad_d)))
    b_pre_p = jnp.pad(b_pre, ((0, 0), (0, pad_d)))
    w_func_p = jnp.pad(w_func, ((0, 0), (0, pad_d), (0, pad_d)))
    b_func_p = jnp.pad(b_func, ((0, 0), (0, 0), (0, pad_d)))
    w_prop_p = jnp.pad(w_prop, ((0, pad_d), (0, 0)))
    vn3 = vn[:, None, :]                                      # (B, 1, G) lane-dense V_n

    try:
        vmem_cap = int(pltpu.get_tpu_info().vmem_capacity_bytes)
    except Exception:
        vmem_cap = 64 << 20                                   # conservative (v7x per-TC VMEM)
    vmem_budget = int(0.75 * vmem_cap)

    if block_b is None:
        block_b = _pick_block_b(B, G, A, Dp, NO, L, vmem_budget)
    assert B % block_b == 0
    footprint = _block_vmem_bytes(block_b, G, A, Dp, NO, L)
    vmem_limit = int(min(vmem_budget, max(32 << 20, 2 * footprint)))

    kernel = functools.partial(
        qdf_kernel, dim=D, dim_pad=Dp, layer_functional=L, operation=operation,
        block_b=block_b, n_fields=G, n_output=NO, q_max=q_max, mxu_bf16=mxu_bf16)

    grid_spec = pltpu.PrefetchScalarGridSpec(
        num_scalar_prefetch=0,
        grid=(B // block_b,),
        in_specs=[
            pl.BlockSpec((block_b, G, A), lambda i: (i, 0, 0)),     # distances
            pl.BlockSpec((block_b, 1, A), lambda i: (i, 0, 0)),     # quantum numbers
            pl.BlockSpec((block_b, 1, A), lambda i: (i, 0, 0)),     # zeta
            pl.BlockSpec((block_b, A, Dp), lambda i: (i, 0, 0)),    # raw LCAO coefficients
            pl.BlockSpec((block_b, 1, 1), lambda i: (i, 0, 0)),     # N_electrons
            pl.BlockSpec((block_b, 1, G), lambda i: (i, 0, 0)),     # V_n (lane-dense)
            pl.BlockSpec((1, Dp), lambda i: (0, 0)),                # W_pre_func.weight.T
            pl.BlockSpec((1, Dp), lambda i: (0, 0)),                # W_pre_func.bias
            pl.BlockSpec((L, Dp, Dp), lambda i: (0, 0, 0)),         # W_functional weights (.T)
            pl.BlockSpec((L, 1, Dp), lambda i: (0, 0, 0)),          # W_functional biases
            pl.BlockSpec((Dp, NO), lambda i: (0, 0)),               # W_property.weight.T
            pl.BlockSpec((1, NO), lambda i: (0, 0)),                # W_property.bias
        ],
        out_specs=[
            pl.BlockSpec((block_b, 1, 2 * NO), lambda i: (i, 0, 0)),  # packed [E_, E_xcH]
            pl.BlockSpec((block_b, G, Dp), lambda i: (i, 0, 0)),      # molecular orbitals
            pl.BlockSpec((block_b, 1, G), lambda i: (i, 0, 0)),       # densities (lane-dense)
        ],
        scratch_shapes=[pltpu.VMEM((block_b * G, Dp), jnp.float32)],
    )
    out_shape = (
        jax.ShapeDtypeStruct((B, 1, 2 * NO), jnp.float32),
        jax.ShapeDtypeStruct((B, G, Dp), jnp.float32),
        jax.ShapeDtypeStruct((B, 1, G), jnp.float32),
    )
    e_packed, mo_pad, dens = pl.pallas_call(
        kernel,
        grid_spec=grid_spec,
        out_shape=out_shape,
        compiler_params=pltpu.CompilerParams(
            dimension_semantics=("parallel",),
            vmem_limit_bytes=vmem_limit),
    )(dist, qn, zeta, coef_p, nelec, vn3,
      w_pre_p, b_pre_p, w_func_p, b_func_p, w_prop_p, b_prop)
    return (e_packed[:, 0, :NO], e_packed[:, 0, NO:],
            mo_pad[:, :, :D], dens[:, 0, :])


def reference_forward(dist, qn, zeta, coef, nelec, vn,
                      w_pre, b_pre, w_func, b_func, w_prop, b_prop, operation="sum"):
    """Pure-JAX transcription of the PyTorch forward (per molecule, f32 throughout)."""
    D = coef.shape[-1]
    L = w_func.shape[0]

    def per_mol(d, q, z, c, ne, v):
        gto = d ** (q - 1.0) * jnp.exp(-(z * d) ** 2)
        denom_g = jnp.maximum(jnp.sqrt(jnp.sum(gto * gto, axis=0, keepdims=True)), EPS)
        n_gto = gto / denom_g
        poly = (4.0 * z ** 4 * d ** 4 - 2.0 * z ** 2 * (2.0 * q + 1.0) * d ** 2
                + q * (q - 1.0))
        l_gto = d ** (q - 3.0) * jnp.exp(-(z ** 2) * d ** 2) * poly / denom_g
        cn = c / jnp.maximum(jnp.sqrt(jnp.sum(c * c, axis=0, keepdims=True)), EPS)
        mo_raw = n_gto @ cn
        l_mo_raw = l_gto @ cn
        denom_mo = jnp.maximum(jnp.sqrt(jnp.sum(mo_raw * mo_raw, axis=0, keepdims=True)), EPS)
        scale = jnp.sqrt(ne[0, 0] / float(D))
        mo = scale * mo_raw / denom_mo
        l_mo = scale * l_mo_raw / denom_mo
        dens = jnp.sum(mo * mo, axis=1)                       # (G,)
        h = dens[:, None] * w_pre + b_pre
        for l in range(L):
            h = jnp.maximum(h @ w_func[l] + b_func[l], 0.0)
        pooled = (jnp.sum(h, axis=0, keepdims=True) if operation == "sum"
                  else jnp.mean(h, axis=0, keepdims=True))
        e_xch = pooled @ w_prop + b_prop
        e_n = jnp.sum(v * dens)
        e_k = 0.5 * jnp.sum(mo * l_mo)
        e_ = e_xch + e_n - e_k
        return e_[0], e_xch[0], mo, dens

    return jax.vmap(per_mol)(dist, qn, zeta, coef, nelec, vn)


if __name__ == "__main__":
    # Small, module-consistent shapes.
    B, G, A, D, L, NO = 4, 16, 8, 32, 2, 1   # batch, fields/mol, orbitals/mol, dim, layers, N_output
    N_ORBITALS = 10                          # embedding vocabulary (N_orbitals)
    key = jax.random.PRNGKey(0)
    ks = jax.random.split(key, 12)

    # --- parameters (deterministic init; shapes match the module __init__) ---
    coef_table = jax.random.normal(ks[0], (N_ORBITALS, D), jnp.float32)       # nn.Embedding(N_orbitals, dim)
    zeta_table = jnp.ones((N_ORBITALS, 1), jnp.float32)                       # nn.Embedding + init.ones_
    w_pre = jax.random.normal(ks[1], (1, D), jnp.float32) * 0.5               # W_pre_func.weight.T
    b_pre = jax.random.normal(ks[2], (1, D), jnp.float32) * 0.1               # W_pre_func.bias
    w_func = jax.random.normal(ks[3], (L, D, D), jnp.float32) / np.sqrt(D)    # W_functional[l].weight.T
    b_func = jax.random.normal(ks[4], (L, 1, D), jnp.float32) * 0.1           # W_functional[l].bias
    w_prop = jax.random.normal(ks[5], (D, NO), jnp.float32) / np.sqrt(D)      # W_property.weight.T
    b_prop = jax.random.normal(ks[6], (1, NO), jnp.float32) * 0.1             # W_property.bias
    # TODO(synk): W_density / W_HK / W_potential (hidden_HK, layer_HK) are declared in
    #             __init__ but never used in forward(); intentionally omitted.
    # TODO(synk): the train branch (autograd of E_xcH wrt densities, loss1/loss2) has no
    #             clean in-kernel Pallas equivalent; only the forward energy path is done.

    # --- synthetic inputs (the per-molecule lists, batched with equal sizes) ---
    ao_idx = jax.random.randint(ks[7], (B, A), 0, N_ORBITALS)                 # atomic_orbitals
    dist = jax.random.uniform(ks[8], (B, G, A), jnp.float32, 0.5, 3.0)        # distance_matrices
    qn = jax.random.randint(ks[9], (B, 1, A), 1, 4).astype(jnp.float32)       # quantum_numbers
    nelec = jnp.array([8.0, 10.0, 12.0, 14.0], jnp.float32).reshape(B, 1, 1)  # N_electrons
    vn = jax.random.normal(ks[10], (B, G), jnp.float32)                       # V_n (data[7])

    # Embedding lookups are glue (gather) done in plain JAX.
    coef = coef_table[ao_idx]                       # (B, A, D)
    zeta = zeta_table[ao_idx][..., 0][:, None, :]   # (B, 1, A)

    args = (dist, qn, zeta, coef, nelec, vn,
            w_pre, b_pre, w_func, b_func, w_prop, b_prop)

    # f32 MXU path: tight parity against the pure-JAX reference of the PyTorch forward.
    e_, e_xch, mo, dens = jax.block_until_ready(
        qdf_forward(*args, operation="sum", mxu_bf16=False))
    e_want, e_xch_want, mo_want, dens_want = reference_forward(*args, operation="sum")
    np.testing.assert_allclose(np.asarray(e_), np.asarray(e_want), rtol=5e-3, atol=5e-3)
    np.testing.assert_allclose(np.asarray(e_xch), np.asarray(e_xch_want), rtol=5e-3, atol=5e-3)
    np.testing.assert_allclose(np.asarray(mo), np.asarray(mo_want), rtol=5e-3, atol=5e-3)
    np.testing.assert_allclose(np.asarray(dens), np.asarray(dens_want), rtol=5e-3, atol=5e-3)

    # bf16 MXU path (production setting): looser parity against the f32 kernel.
    e_b, e_xch_b, mo_b, dens_b = jax.block_until_ready(
        qdf_forward(*args, operation="sum", mxu_bf16=True))
    np.testing.assert_allclose(np.asarray(e_b), np.asarray(e_), rtol=3e-2, atol=3e-2)
    np.testing.assert_allclose(np.asarray(mo_b), np.asarray(mo), rtol=3e-2, atol=3e-2)

    print("KERNEL_OK")
</pallas_src>

<mosaic_0001>
module attributes {stable_mosaic.version = 11 : i64} {
  func.func @qdf_kernel(%arg0: i32, %arg1: memref<2x16x8xf32, #tpu.memory_space<vmem>>, %arg2: memref<2x1x8xf32, #tpu.memory_space<vmem>>, %arg3: memref<2x1x8xf32, #tpu.memory_space<vmem>>, %arg4: memref<2x8x128xf32, #tpu.memory_space<vmem>>, %arg5: memref<2x1x1xf32, #tpu.memory_space<vmem>>, %arg6: memref<2x1x16xf32, #tpu.memory_space<vmem>>, %arg7: memref<1x128xf32, #tpu.memory_space<vmem>>, %arg8: memref<1x128xf32, #tpu.memory_space<vmem>>, %arg9: memref<2x128x128xf32, #tpu.memory_space<vmem>>, %arg10: memref<2x1x128xf32, #tpu.memory_space<vmem>>, %arg11: memref<128x1xf32, #tpu.memory_space<vmem>>, %arg12: memref<1x1xf32, #tpu.memory_space<vmem>>, %arg13: memref<2x1x2xf32, #tpu.memory_space<vmem>>, %arg14: memref<2x16x128xf32, #tpu.memory_space<vmem>>, %arg15: memref<2x1x16xf32, #tpu.memory_space<vmem>>, %arg16: memref<32x128xf32, #tpu.memory_space<vmem>>) attributes {dimension_semantics = [#tpu.dimension_semantics<parallel>], iteration_bounds = array<i64: 2>, scalar_prefetch = 0 : i64, scratch_operands = 1 : i64, tpu.core_type = #tpu.core_type<tc>, window_params = [{transform_indices = @transform_0, window_bounds = array<i64: 2, 16, 8>}, {transform_indices = @transform_1, window_bounds = array<i64: 2, 1, 8>}, {transform_indices = @transform_2, window_bounds = array<i64: 2, 1, 8>}, {transform_indices = @transform_3, window_bounds = array<i64: 2, 8, 128>}, {transform_indices = @transform_4, window_bounds = array<i64: 2, 1, 1>}, {transform_indices = @transform_5, window_bounds = array<i64: 2, 1, 16>}, {pipeline_mode = #tpu.pipeline_mode<synchronous>, transform_indices = @transform_6, window_bounds = array<i64: 1, 128>}, {pipeline_mode = #tpu.pipeline_mode<synchronous>, transform_indices = @transform_7, window_bounds = array<i64: 1, 128>}, {pipeline_mode = #tpu.pipeline_mode<synchronous>, transform_indices = @transform_8, window_bounds = array<i64: 2, 128, 128>}, {pipeline_mode = #tpu.pipeline_mode<synchronous>, transform_indices = @transform_9, window_bounds = array<i64: 2, 1, 128>}, {pipeline_mode = #tpu.pipeline_mode<synchronous>, transform_indices = @transform_10, window_bounds = array<i64: 128, 1>}, {pipeline_mode = #tpu.pipeline_mode<synchronous>, transform_indices = @transform_11, window_bounds = array<i64: 1, 1>}, {transform_indices = @transform_12, window_bounds = array<i64: 2, 1, 2>}, {transform_indices = @transform_13, window_bounds = array<i64: 2, 16, 128>}, {transform_indices = @transform_14, window_bounds = array<i64: 2, 1, 16>}]} {
    %c0 = arith.constant 0 : index
    %c0_0 = arith.constant 0 : index
    %c0_1 = arith.constant 0 : index
    %0 = vector.load %arg1[%c0, %c0_0, %c0_1] : memref<2x16x8xf32, #tpu.memory_space<vmem>>, vector<2x16x8xf32>
    %c0_2 = arith.constant 0 : index
    %c0_3 = arith.constant 0 : index
    %c0_4 = arith.constant 0 : index
    %1 = vector.load %arg2[%c0_2, %c0_3, %c0_4] : memref<2x1x8xf32, #tpu.memory_space<vmem>>, vector<2x1x8xf32>
    %c0_5 = arith.constant 0 : index
    %c0_6 = arith.constant 0 : index
    %c0_7 = arith.constant 0 : index
    %2 = vector.load %arg3[%c0_5, %c0_6, %c0_7] : memref<2x1x8xf32, #tpu.memory_space<vmem>>, vector<2x1x8xf32>
    %c0_8 = arith.constant 0 : index
    %c0_9 = arith.constant 0 : index
    %c0_10 = arith.constant 0 : index
    %3 = vector.load %arg4[%c0_8, %c0_9, %c0_10] : memref<2x8x128xf32, #tpu.memory_space<vmem>>, vector<2x8x128xf32>
    %c0_11 = arith.constant 0 : index
    %c0_12 = arith.constant 0 : index
    %c0_13 = arith.constant 0 : index
    %4 = vector.load %arg5[%c0_11, %c0_12, %c0_13] : memref<2x1x1xf32, #tpu.memory_space<vmem>>, vector<2x1x1xf32>
    %5 = arith.mulf %0, %0 : vector<2x16x8xf32>
    %6 = arith.mulf %2, %2 : vector<2x1x8xf32>
    %cst = arith.constant 0.000000e+00 : f32
    %7 = vector.broadcast %cst : f32 to vector<2x1x8xf32>
    %8 = arith.subf %7, %6 : vector<2x1x8xf32>
    %9 = vector.broadcast %8 : vector<2x1x8xf32> to vector<2x16x8xf32>
    %10 = arith.mulf %9, %5 : vector<2x16x8xf32>
    %11 = math.exp %10 : vector<2x16x8xf32>
    %cst_14 = arith.constant 1.000000e+00 : f32
    %12 = vector.broadcast %cst_14 : f32 to vector<2x1x8xf32>
    %13 = arith.subf %1, %12 : vector<2x1x8xf32>
    %14 = arith.fptosi %13 : vector<2x1x8xf32> to vector<2x1x8xi32>
    %cst_15 = arith.constant 1.000000e+00 : f32
    %15 = vector.broadcast %cst_15 : f32 to vector<2x16x8xf32>
    %c0_i32 = arith.constant 0 : i32
    %16 = vector.broadcast %c0_i32 : i32 to vector<2x1x8xi32>
    %17 = arith.shrsi %14, %16 : vector<2x1x8xi32>
    %c1_i32 = arith.constant 1 : i32
    %18 = vector.broadcast %c1_i32 : i32 to vector<2x1x8xi32>
    %19 = arith.andi %17, %18 : vector<2x1x8xi32>
    %c1_i32_16 = arith.constant 1 : i32
    %20 = vector.broadcast %c1_i32_16 : i32 to vector<2x1x8xi32>
    %21 = arith.cmpi eq, %19, %20 : vector<2x1x8xi32>
    %22 = arith.mulf %15, %0 : vector<2x16x8xf32>
    %23 = vector.shape_cast %21 : vector<2x1x8xi1> to vector<2x1x8xi1>
    %24 = vector.broadcast %23 : vector<2x1x8xi1> to vector<2x16x8xi1>
    %25 = arith.select %24, %22, %15 : vector<2x16x8xi1>, vector<2x16x8xf32>
    %26 = arith.mulf %0, %0 : vector<2x16x8xf32>
    %c1_i32_17 = arith.constant 1 : i32
    %27 = vector.broadcast %c1_i32_17 : i32 to vector<2x1x8xi32>
    %28 = arith.shrsi %14, %27 : vector<2x1x8xi32>
    %c1_i32_18 = arith.constant 1 : i32
    %29 = vector.broadcast %c1_i32_18 : i32 to vector<2x1x8xi32>
    %30 = arith.andi %28, %29 : vector<2x1x8xi32>
    %c1_i32_19 = arith.constant 1 : i32
    %31 = vector.broadcast %c1_i32_19 : i32 to vector<2x1x8xi32>
    %32 = arith.cmpi eq, %30, %31 : vector<2x1x8xi32>
    %33 = arith.mulf %25, %26 : vector<2x16x8xf32>
    %34 = vector.shape_cast %32 : vector<2x1x8xi1> to vector<2x1x8xi1>
    %35 = vector.broadcast %34 : vector<2x1x8xi1> to vector<2x16x8xi1>
    %36 = arith.select %35, %33, %25 : vector<2x16x8xi1>, vector<2x16x8xf32>
    %37 = arith.mulf %26, %26 : vector<2x16x8xf32>
    %c2_i32 = arith.constant 2 : i32
    %38 = vector.broadcast %c2_i32 : i32 to vector<2x1x8xi32>
    %39 = arith.shrsi %14, %38 : vector<2x1x8xi32>
    %c1_i32_20 = arith.constant 1 : i32
    %40 = vector.broadcast %c1_i32_20 : i32 to vector<2x1x8xi32>
    %41 = arith.andi %39, %40 : vector<2x1x8xi32>
    %c1_i32_21 = arith.constant 1 : i32
    %42 = vector.broadcast %c1_i32_21 : i32 to vector<2x1x8xi32>
    %43 = arith.cmpi eq, %41, %42 : vector<2x1x8xi32>
    %44 = arith.mulf %36, %37 : vector<2x16x8xf32>
    %45 = vector.shape_cast %43 : vector<2x1x8xi1> to vector<2x1x8xi1>
    %46 = vector.broadcast %45 : vector<2x1x8xi1> to vector<2x16x8xi1>
    %47 = arith.select %46, %44, %36 : vector<2x16x8xi1>, vector<2x16x8xf32>
    %48 = arith.mulf %47, %11 : vector<2x16x8xf32>
    %49 = arith.mulf %48, %48 : vector<2x16x8xf32>
    %cst_22 = arith.constant dense<0.000000e+00> : vector<2x8xf32>
    %50 = vector.multi_reduction <add>, %49, %cst_22 [1] : vector<2x16x8xf32> to vector<2x8xf32>
    %51 = vector.shape_cast %50 : vector<2x8xf32> to vector<2x1x8xf32>
    %cst_23 = arith.constant 1.000000e-24 : f32
    %52 = vector.broadcast %cst_23 : f32 to vector<2x1x8xf32>
    %53 = arith.maximumf %51, %52 : vector<2x1x8xf32>
    %54 = math.rsqrt %53 : vector<2x1x8xf32>
    %55 = vector.broadcast %54 : vector<2x1x8xf32> to vector<2x16x8xf32>
    %56 = arith.mulf %48, %55 : vector<2x16x8xf32>
    %cst_24 = arith.constant 4.000000e+00 : f32
    %57 = vector.broadcast %cst_24 : f32 to vector<2x1x8xf32>
    %58 = arith.mulf %57, %6 : vector<2x1x8xf32>
    %59 = arith.mulf %58, %6 : vector<2x1x8xf32>
    %60 = vector.broadcast %59 : vector<2x1x8xf32> to vector<2x16x8xf32>
    %61 = arith.mulf %60, %5 : vector<2x16x8xf32>
    %62 = arith.mulf %61, %5 : vector<2x16x8xf32>
    %cst_25 = arith.constant 2.000000e+00 : f32
    %63 = vector.broadcast %cst_25 : f32 to vector<2x1x8xf32>
    %64 = arith.mulf %63, %6 : vector<2x1x8xf32>
    %cst_26 = arith.constant 2.000000e+00 : f32
    %65 = vector.broadcast %cst_26 : f32 to vector<2x1x8xf32>
    %66 = arith.mulf %65, %1 : vector<2x1x8xf32>
    %cst_27 = arith.constant 1.000000e+00 : f32
    %67 = vector.broadcast %cst_27 : f32 to vector<2x1x8xf32>
    %68 = arith.addf %66, %67 : vector<2x1x8xf32>
    %69 = arith.mulf %64, %68 : vector<2x1x8xf32>
    %70 = vector.broadcast %69 : vector<2x1x8xf32> to vector<2x16x8xf32>
    %71 = arith.mulf %70, %5 : vector<2x16x8xf32>
    %72 = arith.subf %62, %71 : vector<2x16x8xf32>
    %cst_28 = arith.constant 1.000000e+00 : f32
    %73 = vector.broadcast %cst_28 : f32 to vector<2x1x8xf32>
    %74 = arith.subf %1, %73 : vector<2x1x8xf32>
    %75 = arith.mulf %1, %74 : vector<2x1x8xf32>
    %76 = vector.broadcast %75 : vector<2x1x8xf32> to vector<2x16x8xf32>
    %77 = arith.addf %72, %76 : vector<2x16x8xf32>
    %cst_29 = arith.constant 1.000000e-24 : f32
    %78 = vector.broadcast %cst_29 : f32 to vector<2x16x8xf32>
    %79 = arith.maximumf %5, %78 : vector<2x16x8xf32>
    %80 = tpu.reciprocal %79 {approx = true} : vector<2x16x8xf32> -> vector<2x16x8xf32>
    %81 = arith.mulf %47, %80 : vector<2x16x8xf32>
    %82 = arith.mulf %81, %11 : vector<2x16x8xf32>
    %83 = arith.mulf %82, %77 : vector<2x16x8xf32>
    %84 = vector.broadcast %54 : vector<2x1x8xf32> to vector<2x16x8xf32>
    %85 = arith.mulf %83, %84 : vector<2x16x8xf32>
    %86 = arith.mulf %3, %3 : vector<2x8x128xf32>
    %cst_30 = arith.constant dense<0.000000e+00> : vector<2x128xf32>
    %87 = vector.multi_reduction <add>, %86, %cst_30 [1] : vector<2x8x128xf32> to vector<2x128xf32>
    %88 = vector.shape_cast %87 : vector<2x128xf32> to vector<2x1x128xf32>
    %cst_31 = arith.constant 1.000000e-24 : f32
    %89 = vector.broadcast %cst_31 : f32 to vector<2x1x128xf32>
    %90 = arith.maximumf %88, %89 : vector<2x1x128xf32>
    %91 = math.rsqrt %90 : vector<2x1x128xf32>
    %92 = vector.broadcast %91 : vector<2x1x128xf32> to vector<2x8x128xf32>
    %93 = arith.mulf %3, %92 : vector<2x8x128xf32>
    "tpu.trace_start"() <{level = 10 : i32, message = "bga,bad->bgd"}> : () -> ()
    %cst_32 = arith.constant dense<0.000000e+00> : vector<2x16x128xf32>
    %94 = tpu.matmul %56, %93, %cst_32 {dimension_numbers = #tpu.dot_dimension_numbers<[2], [1], [1], [2], [0, 0, 0, 1, 1, 2], [0], [0]>} : vector<2x16x8xf32>, vector<2x8x128xf32>, vector<2x16x128xf32> -> vector<2x16x128xf32>
    %cst_33 = arith.constant dense<0.000000e+00> : vector<2x16x128xf32>
    %95 = tpu.matmul %85, %93, %cst_33 {dimension_numbers = #tpu.dot_dimension_numbers<[2], [1], [1], [2], [0, 0, 0, 1, 1, 2], [0], [0]>} : vector<2x16x8xf32>, vector<2x8x128xf32>, vector<2x16x128xf32> -> vector<2x16x128xf32>
    "tpu.trace_stop"() : () -> ()
    %96 = arith.mulf %94, %94 : vector<2x16x128xf32>
    %cst_34 = arith.constant dense<0.000000e+00> : vector<2x128xf32>
    %97 = vector.multi_reduction <add>, %96, %cst_34 [1] : vector<2x16x128xf32> to vector<2x128xf32>
    %98 = vector.shape_cast %97 : vector<2x128xf32> to vector<2x1x128xf32>
    %cst_35 = arith.constant 1.000000e-24 : f32
    %99 = vector.broadcast %cst_35 : f32 to vector<2x1x128xf32>
    %100 = arith.maximumf %98, %99 : vector<2x1x128xf32>
    %101 = math.rsqrt %100 : vector<2x1x128xf32>
    %102 = arith.mulf %101, %101 : vector<2x1x128xf32>
    %103 = vector.broadcast %4 : vector<2x1x1xf32> to vector<2x1x128xf32>
    %104 = arith.mulf %103, %102 : vector<2x1x128xf32>
    %cst_36 = arith.constant 3.125000e-02 : f32
    %105 = vector.broadcast %cst_36 : f32 to vector<2x1x128xf32>
    %106 = arith.mulf %104, %105 : vector<2x1x128xf32>
    %107 = math.sqrt %106 : vector<2x1x128xf32>
    %108 = vector.broadcast %107 : vector<2x1x128xf32> to vector<2x16x128xf32>
    %109 = arith.mulf %94, %108 : vector<2x16x128xf32>
    %c0_37 = arith.constant 0 : index
    %c0_38 = arith.constant 0 : index
    %c0_39 = arith.constant 0 : index
    %110 = vector.load %arg14[%c0_37, %c0_38, %c0_39] : memref<2x16x128xf32, #tpu.memory_space<vmem>>, vector<2x16x128xf32>
    tpu.vector_store %arg14[%c0_37, %c0_38, %c0_39], %109 {strides = array<i32>} : memref<2x16x128xf32, #tpu.memory_space<vmem>>, vector<2x16x128xf32>,
    %111 = arith.mulf %109, %109 : vector<2x16x128xf32>
    %cst_40 = arith.constant dense<0.000000e+00> : vector<2x16xf32>
    %112 = vector.multi_reduction <add>, %111, %cst_40 [2] : vector<2x16x128xf32> to vector<2x16xf32>
    %113 = vector.shape_cast %112 : vector<2x16xf32> to vector<2x16x1xf32>
    %cst_41 = arith.constant dense<0.000000e+00> : vector<2x16xf32>
    %114 = vector.multi_reduction <add>, %111, %cst_41 [2] : vector<2x16x128xf32> to vector<2x16xf32>
    %115 = vector.shape_cast %114 : vector<2x16xf32> to vector<2x1x16xf32>
    %c0_42 = arith.constant 0 : index
    %c0_43 = arith.constant 0 : index
    %c0_44 = arith.constant 0 : index
    %116 = vector.load %arg15[%c0_42, %c0_43, %c0_44] : memref<2x1x16xf32, #tpu.memory_space<vmem>>, vector<2x1x16xf32>
    tpu.vector_store %arg15[%c0_42, %c0_43, %c0_44], %115 {strides = array<i32>} : memref<2x1x16xf32, #tpu.memory_space<vmem>>, vector<2x1x16xf32>,
    %c0_45 = arith.constant 0 : index
    %c0_46 = arith.constant 0 : index
    %c0_47 = arith.constant 0 : index
    %117 = vector.load %arg6[%c0_45, %c0_46, %c0_47] : memref<2x1x16xf32, #tpu.memory_space<vmem>>, vector<2x1x16xf32>
    %118 = vector.shape_cast %117 : vector<2x1x16xf32> to vector<2x16xf32>
    %119 = arith.mulf %118, %114 : vector<2x16xf32>
    %cst_48 = arith.constant dense<0.000000e+00> : vector<2xf32>
    %120 = vector.multi_reduction <add>, %119, %cst_48 [1] : vector<2x16xf32> to vector<2xf32>
    %121 = vector.shape_cast %120 : vector<2xf32> to vector<2x1xf32>
    %122 = arith.mulf %94, %95 : vector<2x16x128xf32>
    %cst_49 = arith.constant dense<0.000000e+00> : vector<2x128xf32>
    %123 = vector.multi_reduction <add>, %122, %cst_49 [1] : vector<2x16x128xf32> to vector<2x128xf32>
    %124 = vector.shape_cast %106 : vector<2x1x128xf32> to vector<2x128xf32>
    %125 = arith.mulf %123, %124 : vector<2x128xf32>
    %cst_50 = arith.constant dense<0.000000e+00> : vector<2xf32>
    %126 = vector.multi_reduction <add>, %125, %cst_50 [1] : vector<2x128xf32> to vector<2xf32>
    %127 = vector.shape_cast %126 : vector<2xf32> to vector<2x1xf32>
    %cst_51 = arith.constant 5.000000e-01 : f32
    %128 = vector.broadcast %cst_51 : f32 to vector<2x1xf32>
    %129 = arith.mulf %128, %127 : vector<2x1xf32>
    %c0_52 = arith.constant 0 : index
    %c0_53 = arith.constant 0 : index
    %130 = vector.load %arg7[%c0_52, %c0_53] : memref<1x128xf32, #tpu.memory_space<vmem>>, vector<1x128xf32>
    %c0_54 = arith.constant 0 : index
    %c0_55 = arith.constant 0 : index
    %131 = vector.load %arg8[%c0_54, %c0_55] : memref<1x128xf32, #tpu.memory_space<vmem>>, vector<1x128xf32>
    %132 = vector.shape_cast %130 : vector<1x128xf32> to vector<1x1x128xf32>
    %133 = vector.broadcast %113 : vector<2x16x1xf32> to vector<2x16x128xf32>
    %134 = vector.broadcast %132 : vector<1x1x128xf32> to vector<2x16x128xf32>
    %135 = arith.mulf %133, %134 : vector<2x16x128xf32>
    %136 = vector.shape_cast %131 : vector<1x128xf32> to vector<1x1x128xf32>
    %137 = vector.broadcast %136 : vector<1x1x128xf32> to vector<2x16x128xf32>
    %138 = arith.addf %135, %137 : vector<2x16x128xf32>
    %139 = vector.shape_cast %138 : vector<2x16x128xf32> to vector<32x128xf32>
    %c0_56 = arith.constant 0 : index
    %c0_57 = arith.constant 0 : index
    %140 = vector.load %arg16[%c0_56, %c0_57] : memref<32x128xf32, #tpu.memory_space<vmem>>, vector<32x128xf32>
    tpu.vector_store %arg16[%c0_56, %c0_57], %139 {strides = array<i32>} : memref<32x128xf32, #tpu.memory_space<vmem>>, vector<32x128xf32>,
    %c0_58 = arith.constant 0 : index
    %c0_59 = arith.constant 0 : index
    %141 = vector.load %arg16[%c0_58, %c0_59] : memref<32x128xf32, #tpu.memory_space<vmem>>, vector<32x128xf32>
    %c0_60 = arith.constant 0 : index
    %c0_61 = arith.constant 0 : index
    %c0_62 = arith.constant 0 : index
    %142 = vector.load %arg9[%c0_60, %c0_61, %c0_62] : memref<2x128x128xf32, #tpu.memory_space<vmem>>, vector<1x128x128xf32>
    %143 = vector.shape_cast %142 : vector<1x128x128xf32> to vector<128x128xf32>
    %cst_63 = arith.constant dense<0.000000e+00> : vector<32x128xf32>
    %144 = tpu.matmul %141, %143, %cst_63 {dimension_numbers = #tpu.dot_dimension_numbers<[1], [0], [0], [1], [0, 0, 1, 1], [], []>} : vector<32x128xf32>, vector<128x128xf32>, vector<32x128xf32> -> vector<32x128xf32>
    %c0_64 = arith.constant 0 : index
    %c0_65 = arith.constant 0 : index
    %c0_66 = arith.constant 0 : index
    %145 = vector.load %arg10[%c0_64, %c0_65, %c0_66] : memref<2x1x128xf32, #tpu.memory_space<vmem>>, vector<1x1x128xf32>
    %146 = vector.shape_cast %145 : vector<1x1x128xf32> to vector<1x128xf32>
    %147 = vector.broadcast %146 : vector<1x128xf32> to vector<32x128xf32>
    %148 = arith.addf %144, %147 : vector<32x128xf32>
    %cst_67 = arith.constant 0.000000e+00 : f32
    %149 = vector.broadcast %cst_67 : f32 to vector<32x128xf32>
    %150 = arith.maximumf %148, %149 : vector<32x128xf32>
    %c0_68 = arith.constant 0 : index
    %c0_69 = arith.constant 0 : index
    %151 = vector.load %arg16[%c0_68, %c0_69] : memref<32x128xf32, #tpu.memory_space<vmem>>, vector<32x128xf32>
    tpu.vector_store %arg16[%c0_68, %c0_69], %150 {strides = array<i32>} : memref<32x128xf32, #tpu.memory_space<vmem>>, vector<32x128xf32>,
    %c0_70 = arith.constant 0 : index
    %c0_71 = arith.constant 0 : index
    %152 = vector.load %arg16[%c0_70, %c0_71] : memref<32x128xf32, #tpu.memory_space<vmem>>, vector<32x128xf32>
    %c1 = arith.constant 1 : index
    %c0_72 = arith.constant 0 : index
    %c0_73 = arith.constant 0 : index
    %153 = vector.load %arg9[%c1, %c0_72, %c0_73] : memref<2x128x128xf32, #tpu.memory_space<vmem>>, vector<1x128x128xf32>
    %154 = vector.shape_cast %153 : vector<1x128x128xf32> to vector<128x128xf32>
    %cst_74 = arith.constant dense<0.000000e+00> : vector<32x128xf32>
    %155 = tpu.matmul %152, %154, %cst_74 {dimension_numbers = #tpu.dot_dimension_numbers<[1], [0], [0], [1], [0, 0, 1, 1], [], []>} : vector<32x128xf32>, vector<128x128xf32>, vector<32x128xf32> -> vector<32x128xf32>
    %c1_75 = arith.constant 1 : index
    %c0_76 = arith.constant 0 : index
    %c0_77 = arith.constant 0 : index
    %156 = vector.load %arg10[%c1_75, %c0_76, %c0_77] : memref<2x1x128xf32, #tpu.memory_space<vmem>>, vector<1x1x128xf32>
    %157 = vector.shape_cast %156 : vector<1x1x128xf32> to vector<1x128xf32>
    %158 = vector.broadcast %157 : vector<1x128xf32> to vector<32x128xf32>
    %159 = arith.addf %155, %158 : vector<32x128xf32>
    %cst_78 = arith.constant 0.000000e+00 : f32
    %160 = vector.broadcast %cst_78 : f32 to vector<32x128xf32>
    %161 = arith.maximumf %159, %160 : vector<32x128xf32>
    %c0_79 = arith.constant 0 : index
    %c0_80 = arith.constant 0 : index
    %162 = vector.load %arg16[%c0_79, %c0_80] : memref<32x128xf32, #tpu.memory_space<vmem>>, vector<32x128xf32>
    tpu.vector_store %arg16[%c0_79, %c0_80], %161 {strides = array<i32>} : memref<32x128xf32, #tpu.memory_space<vmem>>, vector<32x128xf32>,
    %c0_81 = arith.constant 0 : index
    %c0_82 = arith.constant 0 : index
    %163 = vector.load %arg16[%c0_81, %c0_82] : memref<32x128xf32, #tpu.memory_space<vmem>>, vector<32x128xf32>
    %164 = vector.shape_cast %163 : vector<32x128xf32> to vector<2x16x128xf32>
    %cst_83 = arith.constant dense<0.000000e+00> : vector<2x128xf32>
    %165 = vector.multi_reduction <add>, %164, %cst_83 [1] : vector<2x16x128xf32> to vector<2x128xf32>
    %c0_84 = arith.constant 0 : index
    %c0_85 = arith.constant 0 : index
    %166 = vector.load %arg11[%c0_84, %c0_85] : memref<128x1xf32, #tpu.memory_space<vmem>>, vector<128x1xf32>
    %cst_86 = arith.constant dense<0.000000e+00> : vector<2x1xf32>
    %167 = tpu.matmul %165, %166, %cst_86 {dimension_numbers = #tpu.dot_dimension_numbers<[1], [0], [0], [1], [0, 0, 1, 1], [], []>} : vector<2x128xf32>, vector<128x1xf32>, vector<2x1xf32> -> vector<2x1xf32>
    %c0_87 = arith.constant 0 : index
    %c0_88 = arith.constant 0 : index
    %168 = vector.load %arg12[%c0_87, %c0_88] : memref<1x1xf32, #tpu.memory_space<vmem>>, vector<1x1xf32>
    %169 = vector.broadcast %168 : vector<1x1xf32> to vector<2x1xf32>
    %170 = arith.addf %167, %169 : vector<2x1xf32>
    %171 = arith.addf %170, %121 : vector<2x1xf32>
    %172 = arith.subf %171, %129 : vector<2x1xf32>
    %173 = vector.shape_cast %172 : vector<2x1xf32> to vector<2x1x1xf32>
    %c0_89 = arith.constant 0 : index
    %c0_90 = arith.constant 0 : index
    %c0_91 = arith.constant 0 : index
    %174 = vector.load %arg13[%c0_89, %c0_90, %c0_91] : memref<2x1x2xf32, #tpu.memory_space<vmem>>, vector<2x1x1xf32>
    tpu.vector_store %arg13[%c0_89, %c0_90, %c0_91], %173 {strides = array<i32>} : memref<2x1x2xf32, #tpu.memory_space<vmem>>, vector<2x1x1xf32>,
    %175 = vector.shape_cast %170 : vector<2x1xf32> to vector<2x1x1xf32>
    %c0_92 = arith.constant 0 : index
    %c0_93 = arith.constant 0 : index
    %c1_94 = arith.constant 1 : index
    %176 = vector.load %arg13[%c0_92, %c0_93, %c1_94] : memref<2x1x2xf32, #tpu.memory_space<vmem>>, vector<2x1x1xf32>
    tpu.vector_store %arg13[%c0_92, %c0_93, %c1_94], %175 {strides = array<i32>} : memref<2x1x2xf32, #tpu.memory_space<vmem>>, vector<2x1x1xf32>,
    return
  }
  func.func @transform_0(%arg0: i32) -> (i32, i32, i32) {
    %c0_i32 = arith.constant 0 : i32
    %c0_i32_0 = arith.constant 0 : i32
    %c0_i32_1 = arith.constant 0 : i32
    return %arg0, %c0_i32, %c0_i32_0 : i32, i32, i32
  }
  func.func @transform_1(%arg0: i32) -> (i32, i32, i32) {
    %c0_i32 = arith.constant 0 : i32
    %c0_i32_0 = arith.constant 0 : i32
    %c0_i32_1 = arith.constant 0 : i32
    return %arg0, %c0_i32, %c0_i32_0 : i32, i32, i32
  }
  func.func @transform_2(%arg0: i32) -> (i32, i32, i32) {
    %c0_i32 = arith.constant 0 : i32
    %c0_i32_0 = arith.constant 0 : i32
    %c0_i32_1 = arith.constant 0 : i32
    return %arg0, %c0_i32, %c0_i32_0 : i32, i32, i32
  }
  func.func @transform_3(%arg0: i32) -> (i32, i32, i32) {
    %c0_i32 = arith.constant 0 : i32
    %c0_i32_0 = arith.constant 0 : i32
    %c0_i32_1 = arith.constant 0 : i32
    return %arg0, %c0_i32, %c0_i32_0 : i32, i32, i32
  }
  func.func @transform_4(%arg0: i32) -> (i32, i32, i32) {
    %c0_i32 = arith.constant 0 : i32
    %c0_i32_0 = arith.constant 0 : i32
    %c0_i32_1 = arith.constant 0 : i32
    return %arg0, %c0_i32, %c0_i32_0 : i32, i32, i32
  }
  func.func @transform_5(%arg0: i32) -> (i32, i32, i32) {
    %c0_i32 = arith.constant 0 : i32
    %c0_i32_0 = arith.constant 0 : i32
    %c0_i32_1 = arith.constant 0 : i32
    return %arg0, %c0_i32, %c0_i32_0 : i32, i32, i32
  }
  func.func @transform_6(%arg0: i32) -> (i32, i32) {
    %c0_i32 = arith.constant 0 : i32
    %c0_i32_0 = arith.constant 0 : i32
    %c0_i32_1 = arith.constant 0 : i32
    return %c0_i32, %c0_i32_0 : i32, i32
  }
  func.func @transform_7(%arg0: i32) -> (i32, i32) {
    %c0_i32 = arith.constant 0 : i32
    %c0_i32_0 = arith.constant 0 : i32
    %c0_i32_1 = arith.constant 0 : i32
    return %c0_i32, %c0_i32_0 : i32, i32
  }
  func.func @transform_8(%arg0: i32) -> (i32, i32, i32) {
    %c0_i32 = arith.constant 0 : i32
    %c0_i32_0 = arith.constant 0 : i32
    %c0_i32_1 = arith.constant 0 : i32
    %c0_i32_2 = arith.constant 0 : i32
    return %c0_i32, %c0_i32_0, %c0_i32_1 : i32, i32, i32
  }
  func.func @transform_9(%arg0: i32) -> (i32, i32, i32) {
    %c0_i32 = arith.constant 0 : i32
    %c0_i32_0 = arith.constant 0 : i32
    %c0_i32_1 = arith.constant 0 : i32
    %c0_i32_2 = arith.constant 0 : i32
    return %c0_i32, %c0_i32_0, %c0_i32_1 : i32, i32, i32
  }
  func.func @transform_10(%arg0: i32) -> (i32, i32) {
    %c0_i32 = arith.constant 0 : i32
    %c0_i32_0 = arith.constant 0 : i32
    %c0_i32_1 = arith.constant 0 : i32
    return %c0_i32, %c0_i32_0 : i32, i32
  }
  func.func @transform_11(%arg0: i32) -> (i32, i32) {
    %c0_i32 = arith.constant 0 : i32
    %c0_i32_0 = arith.constant 0 : i32
    %c0_i32_1 = arith.constant 0 : i32
    return %c0_i32, %c0_i32_0 : i32, i32
  }
  func.func @transform_12(%arg0: i32) -> (i32, i32, i32) {
    %c0_i32 = arith.constant 0 : i32
    %c0_i32_0 = arith.constant 0 : i32
    %c0_i32_1 = arith.constant 0 : i32
    return %arg0, %c0_i32, %c0_i32_0 : i32, i32, i32
  }
  func.func @transform_13(%arg0: i32) -> (i32, i32, i32) {
    %c0_i32 = arith.constant 0 : i32
    %c0_i32_0 = arith.constant 0 : i32
    %c0_i32_1 = arith.constant 0 : i32
    return %arg0, %c0_i32, %c0_i32_0 : i32, i32, i32
  }
  func.func @transform_14(%arg0: i32) -> (i32, i32, i32) {
    %c0_i32 = arith.constant 0 : i32
    %c0_i32_0 = arith.constant 0 : i32
    %c0_i32_1 = arith.constant 0 : i32
    return %arg0, %c0_i32, %c0_i32_0 : i32, i32, i32
  }
}

</mosaic_0001>

<llo_original>
// kernel: tpu_custom_call.1
$region0: #{tpu_custom_call.1}
  #allocation0 [shape = 'u32[]', space=smem, size = 0x4, offset = 0x4, fixed_abs, tag = 'smem constant byte address 0x4 - core index']
  #allocation1 [shape = 'u32[72,128]{1,0:T(1,128)}', space=vmem, size = 0x9000, scoped, tag = 'internal scratch']
  #allocation2 [shape = 'f32[32,128]{1,0:T(8,128)}', space=vmem, size = 0x4000, scoped, tag = 'scratch operand']
  #allocation3 [shape = 'f32[1,1]{1,0:T(1,128)S(1)}', space=vmem, size = 0x200, scoped, tag = 'scoped memory for tpu_custom_call.1']
  %s0 = inlined_call_operand.vmem [shape: f32[4,16,8], index: 0, kind: input, shape index: {}]
  %s1 = inlined_call_operand.vmem [shape: f32[4,1,8], index: 1, kind: input, shape index: {}]
  %s2 = inlined_call_operand.vmem [shape: f32[4,1,8], index: 2, kind: input, shape index: {}]
  %s3 = inlined_call_operand.vmem [shape: f32[4,8,128], index: 3, kind: input, shape index: {}]
  %s4 = inlined_call_operand.vmem [shape: f32[4,1,1], index: 4, kind: input, shape index: {}]
  %s5 = inlined_call_operand.vmem [shape: f32[4,1,16], index: 5, kind: input, shape index: {}]
  %s6 = inlined_call_operand.vmem [shape: f32[1,128], index: 6, kind: input, shape index: {}]
  %s7 = inlined_call_operand.vmem [shape: f32[1,128], index: 7, kind: input, shape index: {}]
  %s8 = inlined_call_operand.hbm [shape: f32[2,128,128], index: 8, kind: input, shape index: {}]
  %s9 = inlined_call_operand.vmem [shape: f32[2,1,128], index: 9, kind: input, shape index: {}]
  %s10 = inlined_call_operand.vmem [shape: f32[128,1], index: 10, kind: input, shape index: {}]
  %s11 = inlined_call_operand.<no memory space> [shape: f32[1,1], index: 11, kind: input, shape index: {}]
  %s12 = inlined_call_operand.vmem [shape: f32[4,1,2], index: 12, kind: output, shape index: {0}]
  %s13 = inlined_call_operand.hbm [shape: f32[4,16,128], index: 13, kind: output, shape index: {1}]
  %s14 = inlined_call_operand.hbm [shape: f32[4,1,16], index: 14, kind: output, shape index: {2}]
  %15 = xla_tuple %s12, %s13, %s14
  %s16 = sld [smem:[#allocation0]]
  $region101: #{tpu_custom_call.1} parent=0
    _
  %s18 = ssub.s32 1, %s16
  %s19 = scalar_select 0, %s18, %s16
  %v20 = vstv %s11
  %21 = vst [vmem:[#allocation3] sm:$0x1] %v20
  $region1: #{tpu_custom_call.1} parent=0
    #allocation4 [shape = 'u8[131072]{0}', space=vmem, size = 0x20000, scoped, tag = 'input window, operand 8, single buffered']
    #allocation5 [shape = 's32[2]{0}', space=sflag, size = 0x8, scoped, tag = 'scoped memory for tpu_custom_call.1']
    #allocation6 [shape = 's32[2]{0}', space=sflag, size = 0x8, scoped, tag = 'scoped memory for tpu_custom_call.1']
    #allocation7 [shape = 'u8[32768]{0}', space=vmem, size = 0x8000, scoped, tag = 'output window, operand 1']
    #allocation8 [shape = 'u8[2048]{0}', space=vmem, size = 0x800, scoped, tag = 'output window, operand 2']
    #allocation9 [shape = 's32[2]{0}', space=sflag, size = 0x8, scoped, tag = 'scoped memory for tpu_custom_call.1']
    %22 = vsyncpa [#allocation5], 0
    %23 = vsyncpa [#allocation6], 0
    %s24 = scalar_lea.sflag [#allocation6], 1
    %25 = vsyncpa %s24, 0
    %26 = vsyncpa [#allocation9], 0
    %s27 = scalar_lea.sflag [#allocation9], 1
    %28 = vsyncpa %s27, 0
    loop: start=0, step=1, limit=4
    $region2: #{tpu_custom_call.1} parent=1 // loop_pre_header
      _
    $region3: #{tpu_custom_call.1} parent=1 // loop_header
      %s30 = sphi 0, %s34
      %p31 = scmp.ge.s32.totalorder %s30, 4
      %s40 = sphi 0, %s42
      %s43 = sphi 0, %s40
      %s44 = sphi 0, %s43
      %s60 = sphi 0, %s44
      %s66 = sphi 0, %s68
      %s69 = sphi 0, %s66
      %s70 = sphi 0, %s69
      %s86 = sphi 0, %s70
      %s92 = sphi 0, %s94
      %s95 = sphi 0, %s92
      %s96 = sphi 0, %s95
      %s112 = sphi 0, %s96
      %s118 = sphi 0, %s120
      %s121 = sphi 0, %s118
      %s122 = sphi 0, %s121
      %s138 = sphi 0, %s122
      %s144 = sphi 0, %s146
      %s147 = sphi 0, %s144
      %s148 = sphi 0, %s147
      %s164 = sphi 0, %s148
      %s170 = sphi 0, %s172
      %s173 = sphi 0, %s170
      %s174 = sphi 0, %s173
      %s190 = sphi 0, %s174
      %s194 = sphi 0, %s194
      %s196 = sphi 0, %s194
      %s197 = sphi 0, %s196
      %s211 = sphi 0, %s197
      %s215 = sphi 0, %s215
      %s217 = sphi 0, %s215
      %s218 = sphi 0, %s217
      %s232 = sphi 0, %s218
      %s236 = sphi 0, %s236
      %s238 = sphi 0, %s236
      %s239 = sphi 0, %s238
      %s253 = sphi 0, %s239
      %s257 = sphi 0, %s257
      %s259 = sphi 0, %s257
      %s260 = sphi 0, %s259
      %s274 = sphi 0, %s260
      %s278 = sphi 0, %s278
      %s280 = sphi 0, %s278
      %s281 = sphi 0, %s280
      %s295 = sphi 0, %s281
      %s299 = sphi 0, %s299
      %s301 = sphi 0, %s299
      %s302 = sphi 0, %s301
      %s316 = sphi 0, %s302
      %s322 = sphi 0, %s324
      %s325 = sphi 0, %s322
      %s326 = sphi 0, %s325
      %s342 = sphi 0, %s326
      %s348 = sphi 0, %s350
      %s351 = sphi 0, %s348
      %s352 = sphi 0, %s351
      %s368 = sphi 0, %s352
      %s374 = sphi 0, %s376
      %s377 = sphi 0, %s374
      %s378 = sphi 0, %s377
      %s394 = sphi 0, %s378
    $region4: #{tpu_custom_call.1} parent=1 // loop_header_branch
      %33 = sbr.rel (%p31) target = $region8
    $region5: #{tpu_custom_call.1} parent=1 // loop_body
      %s35 = ssub.s32 %s30, 1
      %s36 = ssub.s32 %s30, 2
      %s37 = sadd.s32 %s30, 1
      %s38 = ssub.s32 %s30, %s37
      %p39 = scmp.eq.s32.totalorder %s38, 0
      %s41 = sadd.s32 %s40, 1
      %s42 = scalar_select %p39, %s40, %s41
      %p45 = pneg %p39
      %p46 = scmp.eq.s32.totalorder %s30, 1
      %p47 = por %p45, %p46
      %p48 = scmp.ne.s32.totalorder %s40, %s43
      %p49 = scmp.eq.s32.totalorder %s30, 0
      %p50 = por %p48, %p49
      %p51 = scmp.ne.s32.totalorder %s40, %s43
      %p52 = scmp.eq.s32.totalorder %s35, 1
      %p53 = por %p51, %p52
      %p54 = scmp.ne.s32.totalorder %s43, %s44
      %p55 = scmp.eq.s32.totalorder %s35, 0
      %p56 = por %p54, %p55
      %p57 = scmp.ne.s32.totalorder %s43, %s44
      %p58 = scmp.eq.s32.totalorder %s36, 1
      %p59 = por %p57, %p58
      %p61 = scmp.ne.s32.totalorder %s44, %s60
      %p62 = scmp.eq.s32.totalorder %s36, 0
      %p63 = por %p61, %p62
      %s64 = ssub.s32 %s30, %s37
      %p65 = scmp.eq.s32.totalorder %s64, 0
      %s67 = sadd.s32 %s66, 1
      %s68 = scalar_select %p65, %s66, %s67
      %p71 = pneg %p65
      %p72 = scmp.eq.s32.totalorder %s30, 1
      %p73 = por %p71, %p72
      %p74 = scmp.ne.s32.totalorder %s66, %s69
      %p75 = scmp.eq.s32.totalorder %s30, 0
      %p76 = por %p74, %p75
      %p77 = scmp.ne.s32.totalorder %s66, %s69
      %p78 = scmp.eq.s32.totalorder %s35, 1
      %p79 = por %p77, %p78
      %p80 = scmp.ne.s32.totalorder %s69, %s70
      %p81 = scmp.eq.s32.totalorder %s35, 0
      %p82 = por %p80, %p81
      %p83 = scmp.ne.s32.totalorder %s69, %s70
      %p84 = scmp.eq.s32.totalorder %s36, 1
      %p85 = por %p83, %p84
      %p87 = scmp.ne.s32.totalorder %s70, %s86
      %p88 = scmp.eq.s32.totalorder %s36, 0
      %p89 = por %p87, %p88
      %s90 = ssub.s32 %s30, %s37
      %p91 = scmp.eq.s32.totalorder %s90, 0
      %s93 = sadd.s32 %s92, 1
      %s94 = scalar_select %p91, %s92, %s93
      %p97 = pneg %p91
      %p98 = scmp.eq.s32.totalorder %s30, 1
      %p99 = por %p97, %p98
      %p100 = scmp.ne.s32.totalorder %s92, %s95
      %p101 = scmp.eq.s32.totalorder %s30, 0
      %p102 = por %p100, %p101
      %p103 = scmp.ne.s32.totalorder %s92, %s95
      %p104 = scmp.eq.s32.totalorder %s35, 1
      %p105 = por %p103, %p104
      %p106 = scmp.ne.s32.totalorder %s95, %s96
      %p107 = scmp.eq.s32.totalorder %s35, 0
      %p108 = por %p106, %p107
      %p109 = scmp.ne.s32.totalorder %s95, %s96
      %p110 = scmp.eq.s32.totalorder %s36, 1
      %p111 = por %p109, %p110
      %p113 = scmp.ne.s32.totalorder %s96, %s112
      %p114 = scmp.eq.s32.totalorder %s36, 0
      %p115 = por %p113, %p114
      %s116 = ssub.s32 %s30, %s37
      %p117 = scmp.eq.s32.totalorder %s116, 0
      %s119 = sadd.s32 %s118, 1
      %s120 = scalar_select %p117, %s118, %s119
      %p123 = pneg %p117
      %p124 = scmp.eq.s32.totalorder %s30, 1
      %p125 = por %p123, %p124
      %p126 = scmp.ne.s32.totalorder %s118, %s121
      %p127 = scmp.eq.s32.totalorder %s30, 0
      %p128 = por %p126, %p127
      %p129 = scmp.ne.s32.totalorder %s118, %s121
      %p130 = scmp.eq.s32.totalorder %s35, 1
      %p131 = por %p129, %p130
      %p132 = scmp.ne.s32.totalorder %s121, %s122
      %p133 = scmp.eq.s32.totalorder %s35, 0
      %p134 = por %p132, %p133
      %p135 = scmp.ne.s32.totalorder %s121, %s122
      %p136 = scmp.eq.s32.totalorder %s36, 1
      %p137 = por %p135, %p136
      %p139 = scmp.ne.s32.totalorder %s122, %s138
      %p140 = scmp.eq.s32.totalorder %s36, 0
      %p141 = por %p139, %p140
      %s142 = ssub.s32 %s30, %s37
      %p143 = scmp.eq.s32.totalorder %s142, 0
      %s145 = sadd.s32 %s144, 1
      %s146 = scalar_select %p143, %s144, %s145
      %p149 = pneg %p143
      %p150 = scmp.eq.s32.totalorder %s30, 1
      %p151 = por %p149, %p150
      %p152 = scmp.ne.s32.totalorder %s144, %s147
      %p153 = scmp.eq.s32.totalorder %s30, 0
      %p154 = por %p152, %p153
      %p155 = scmp.ne.s32.totalorder %s144, %s147
      %p156 = scmp.eq.s32.totalorder %s35, 1
      %p157 = por %p155, %p156
      %p158 = scmp.ne.s32.totalorder %s147, %s148
      %p159 = scmp.eq.s32.totalorder %s35, 0
      %p160 = por %p158, %p159
      %p161 = scmp.ne.s32.totalorder %s147, %s148
      %p162 = scmp.eq.s32.totalorder %s36, 1
      %p163 = por %p161, %p162
      %p165 = scmp.ne.s32.totalorder %s148, %s164
      %p166 = scmp.eq.s32.totalorder %s36, 0
      %p167 = por %p165, %p166
      %s168 = ssub.s32 %s30, %s37
      %p169 = scmp.eq.s32.totalorder %s168, 0
      %s171 = sadd.s32 %s170, 1
      %s172 = scalar_select %p169, %s170, %s171
      %p175 = pneg %p169
      %p176 = scmp.eq.s32.totalorder %s30, 1
      %p177 = por %p175, %p176
      %p178 = scmp.ne.s32.totalorder %s170, %s173
      %p179 = scmp.eq.s32.totalorder %s30, 0
      %p180 = por %p178, %p179
      %p181 = scmp.ne.s32.totalorder %s170, %s173
      %p182 = scmp.eq.s32.totalorder %s35, 1
      %p183 = por %p181, %p182
      %p184 = scmp.ne.s32.totalorder %s173, %s174
      %p185 = scmp.eq.s32.totalorder %s35, 0
      %p186 = por %p184, %p185
      %p187 = scmp.ne.s32.totalorder %s173, %s174
      %p188 = scmp.eq.s32.totalorder %s36, 1
      %p189 = por %p187, %p188
      %p191 = scmp.ne.s32.totalorder %s174, %s190
      %p192 = scmp.eq.s32.totalorder %s36, 0
      %p193 = por %p191, %p192
      %s195 = sadd.s32 %s194, 1
      %p198 = scmp.eq.s32.totalorder %s30, 1
      %p199 = scmp.ne.s32.totalorder %s194, %s196
      %p200 = scmp.eq.s32.totalorder %s30, 0
      %p201 = por %p199, %p200
      %p202 = scmp.ne.s32.totalorder %s194, %s196
      %p203 = scmp.eq.s32.totalorder %s35, 1
      %p204 = por %p202, %p203
      %p205 = scmp.ne.s32.totalorder %s196, %s197
      %p206 = scmp.eq.s32.totalorder %s35, 0
      %p207 = por %p205, %p206
      %p208 = scmp.ne.s32.totalorder %s196, %s197
      %p209 = scmp.eq.s32.totalorder %s36, 1
      %p210 = por %p208, %p209
      %p212 = scmp.ne.s32.totalorder %s197, %s211
      %p213 = scmp.eq.s32.totalorder %s36, 0
      %p214 = por %p212, %p213
      %s216 = sadd.s32 %s215, 1
      %p219 = scmp.eq.s32.totalorder %s30, 1
      %p220 = scmp.ne.s32.totalorder %s215, %s217
      %p221 = scmp.eq.s32.totalorder %s30, 0
      %p222 = por %p220, %p221
      %p223 = scmp.ne.s32.totalorder %s215, %s217
      %p224 = scmp.eq.s32.totalorder %s35, 1
      %p225 = por %p223, %p224
      %p226 = scmp.ne.s32.totalorder %s217, %s218
      %p227 = scmp.eq.s32.totalorder %s35, 0
      %p228 = por %p226, %p227
      %p229 = scmp.ne.s32.totalorder %s217, %s218
      %p230 = scmp.eq.s32.totalorder %s36, 1
      %p231 = por %p229, %p230
      %p233 = scmp.ne.s32.totalorder %s218, %s232
      %p234 = scmp.eq.s32.totalorder %s36, 0
      %p235 = por %p233, %p234
      %s237 = sadd.s32 %s236, 1
      %p240 = scmp.eq.s32.totalorder %s30, 1
      %p241 = scmp.ne.s32.totalorder %s236, %s238
      %p242 = scmp.eq.s32.totalorder %s30, 0
      %p243 = por %p241, %p242
      %p244 = scmp.ne.s32.totalorder %s236, %s238
      %p245 = scmp.eq.s32.totalorder %s35, 1
      %p246 = por %p244, %p245
      %p247 = scmp.ne.s32.totalorder %s238, %s239
      %p248 = scmp.eq.s32.totalorder %s35, 0
      %p249 = por %p247, %p248
      %p250 = scmp.ne.s32.totalorder %s238, %s239
      %p251 = scmp.eq.s32.totalorder %s36, 1
      %p252 = por %p250, %p251
      %p254 = scmp.ne.s32.totalorder %s239, %s253
      %p255 = scmp.eq.s32.totalorder %s36, 0
      %p256 = por %p254, %p255
      %s258 = sadd.s32 %s257, 1
      %p261 = scmp.eq.s32.totalorder %s30, 1
      %p262 = scmp.ne.s32.totalorder %s257, %s259
      %p263 = scmp.eq.s32.totalorder %s30, 0
      %p264 = por %p262, %p263
      %p265 = scmp.ne.s32.totalorder %s257, %s259
      %p266 = scmp.eq.s32.totalorder %s35, 1
      %p267 = por %p265, %p266
      %p268 = scmp.ne.s32.totalorder %s259, %s260
      %p269 = scmp.eq.s32.totalorder %s35, 0
      %p270 = por %p268, %p269
      %p271 = scmp.ne.s32.totalorder %s259, %s260
      %p272 = scmp.eq.s32.totalorder %s36, 1
      %p273 = por %p271, %p272
      %p275 = scmp.ne.s32.totalorder %s260, %s274
      %p276 = scmp.eq.s32.totalorder %s36, 0
      %p277 = por %p275, %p276
      %s279 = sadd.s32 %s278, 1
      %p282 = scmp.eq.s32.totalorder %s30, 1
      %p283 = scmp.ne.s32.totalorder %s278, %s280
      %p284 = scmp.eq.s32.totalorder %s30, 0
      %p285 = por %p283, %p284
      %p286 = scmp.ne.s32.totalorder %s278, %s280
      %p287 = scmp.eq.s32.totalorder %s35, 1
      %p288 = por %p286, %p287
      %p289 = scmp.ne.s32.totalorder %s280, %s281
      %p290 = scmp.eq.s32.totalorder %s35, 0
      %p291 = por %p289, %p290
      %p292 = scmp.ne.s32.totalorder %s280, %s281
      %p293 = scmp.eq.s32.totalorder %s36, 1
      %p294 = por %p292, %p293
      %p296 = scmp.ne.s32.totalorder %s281, %s295
      %p297 = scmp.eq.s32.totalorder %s36, 0
      %p298 = por %p296, %p297
      %s300 = sadd.s32 %s299, 1
      %p303 = scmp.eq.s32.totalorder %s30, 1
      %p304 = scmp.ne.s32.totalorder %s299, %s301
      %p305 = scmp.eq.s32.totalorder %s30, 0
      %p306 = por %p304, %p305
      %p307 = scmp.ne.s32.totalorder %s299, %s301
      %p308 = scmp.eq.s32.totalorder %s35, 1
      %p309 = por %p307, %p308
      %p310 = scmp.ne.s32.totalorder %s301, %s302
      %p311 = scmp.eq.s32.totalorder %s35, 0
      %p312 = por %p310, %p311
      %p313 = scmp.ne.s32.totalorder %s301, %s302
      %p314 = scmp.eq.s32.totalorder %s36, 1
      %p315 = por %p313, %p314
      %p317 = scmp.ne.s32.totalorder %s302, %s316
      %p318 = scmp.eq.s32.totalorder %s36, 0
      %p319 = por %p317, %p318
      %s320 = ssub.s32 %s30, %s37
      %p321 = scmp.eq.s32.totalorder %s320, 0
      %s323 = sadd.s32 %s322, 1
      %s324 = scalar_select %p321, %s322, %s323
      %p327 = pneg %p321
      %p328 = scmp.eq.s32.totalorder %s30, 1
      %p329 = por %p327, %p328
      %p330 = scmp.ne.s32.totalorder %s322, %s325
      %p331 = scmp.eq.s32.totalorder %s30, 0
      %p332 = por %p330, %p331
      %p333 = scmp.ne.s32.totalorder %s322, %s325
      %p334 = scmp.eq.s32.totalorder %s35, 1
      %p335 = por %p333, %p334
      %p336 = scmp.ne.s32.totalorder %s325, %s326
      %p337 = scmp.eq.s32.totalorder %s35, 0
      %p338 = por %p336, %p337
      %p339 = scmp.ne.s32.totalorder %s325, %s326
      %p340 = scmp.eq.s32.totalorder %s36, 1
      %p341 = por %p339, %p340
      %p343 = scmp.ne.s32.totalorder %s326, %s342
      %p344 = scmp.eq.s32.totalorder %s36, 0
      %p345 = por %p343, %p344
      %s346 = ssub.s32 %s30, %s37
      %p347 = scmp.eq.s32.totalorder %s346, 0
      %s349 = sadd.s32 %s348, 1
      %s350 = scalar_select %p347, %s348, %s349
      %p353 = pneg %p347
      %p354 = scmp.eq.s32.totalorder %s30, 1
      %p355 = por %p353, %p354
      %p356 = scmp.ne.s32.totalorder %s348, %s351
      %p357 = scmp.eq.s32.totalorder %s30, 0
      %p358 = por %p356, %p357
      %p359 = scmp.ne.s32.totalorder %s348, %s351
      %p360 = scmp.eq.s32.totalorder %s35, 1
      %p361 = por %p359, %p360
      %p362 = scmp.ne.s32.totalorder %s351, %s352
      %p363 = scmp.eq.s32.totalorder %s35, 0
      %p364 = por %p362, %p363
      %p365 = scmp.ne.s32.totalorder %s351, %s352
      %p366 = scmp.eq.s32.totalorder %s36, 1
      %p367 = por %p365, %p366
      %p369 = scmp.ne.s32.totalorder %s352, %s368
      %p370 = scmp.eq.s32.totalorder %s36, 0
      %p371 = por %p369, %p370
      %s372 = ssub.s32 %s30, %s37
      %p373 = scmp.eq.s32.totalorder %s372, 0
      %s375 = sadd.s32 %s374, 1
      %s376 = scalar_select %p373, %s374, %s375
      %p379 = pneg %p373
      %p380 = scmp.eq.s32.totalorder %s30, 1
      %p381 = por %p379, %p380
      %p382 = scmp.ne.s32.totalorder %s374, %s377
      %p383 = scmp.eq.s32.totalorder %s30, 0
      %p384 = por %p382, %p383
      %p385 = scmp.ne.s32.totalorder %s374, %s377
      %p386 = scmp.eq.s32.totalorder %s35, 1
      %p387 = por %p385, %p386
      %p388 = scmp.ne.s32.totalorder %s377, %s378
      %p389 = scmp.eq.s32.totalorder %s35, 0
      %p390 = por %p388, %p389
      %p391 = scmp.ne.s32.totalorder %s377, %s378
      %p392 = scmp.eq.s32.totalorder %s36, 1
      %p393 = por %p391, %p392
      %p395 = scmp.ne.s32.totalorder %s378, %s394
      %p396 = scmp.eq.s32.totalorder %s36, 0
      %p397 = por %p395, %p396
      %p398 = scmp.le.s32.totalorder 1, %s30
      %p399 = scmp.lt.s32.totalorder %s30, 3
      %p400 = pnand %p398, %p399
      %p401 = pneg %p400
      // Predicated region
      $region9: #{tpu_custom_call.1} parent=5 // pred_check
        _
      $region10: #{tpu_custom_call.1} parent=5 // pred_check_branch
        %403 = sbr.rel (%p400) target = $region12
      $region11: #{tpu_custom_call.1} parent=5 // pred_region
        %s404 = ssub.s32 %s30, 1
        // Predicated region
        $region13: #{tpu_custom_call.1} parent=11 // pred_check
          %p405 = pneg %p207
        $region14: #{tpu_custom_call.1} parent=11 // pred_check_branch
          %407 = sbr.rel (%p405) target = $region16
        $region15: #{tpu_custom_call.1} parent=11 // pred_region
          _
        $region16: #{tpu_custom_call.1} parent=11 // pred_fallthru
          _
        // Predicated region
        $region17: #{tpu_custom_call.1} parent=11 // pred_check
          %p408 = pneg %p228
        $region18: #{tpu_custom_call.1} parent=11 // pred_check_branch
          %410 = sbr.rel (%p408) target = $region20
        $region19: #{tpu_custom_call.1} parent=11 // pred_region
          _
        $region20: #{tpu_custom_call.1} parent=11 // pred_fallthru
          _
        // Predicated region
        $region21: #{tpu_custom_call.1} parent=11 // pred_check
          %p411 = pneg %p249
        $region22: #{tpu_custom_call.1} parent=11 // pred_check_branch
          %413 = sbr.rel (%p411) target = $region24
        $region23: #{tpu_custom_call.1} parent=11 // pred_region
          %415 = vsyncadd [#allocation5], 0
          %s416 = sshll.u32 %s8, 4
          %s417 = int_to_ptr.hbm [resolvable:$true] %s416
          %s418 = sshll.u32 [#allocation4], 4
          %s419 = int_to_ptr.vmem [resolvable:$true] %s418
          %424 = dma.hbm_to_vmem [thread:$0]  %s417, 4096, %s419, [#allocation5], 128, 128, 8
        $region24: #{tpu_custom_call.1} parent=11 // pred_fallthru
          _
        // Predicated region
        $region25: #{tpu_custom_call.1} parent=11 // pred_check
          %p425 = pneg %p270
        $region26: #{tpu_custom_call.1} parent=11 // pred_check_branch
          %427 = sbr.rel (%p425) target = $region28
        $region27: #{tpu_custom_call.1} parent=11 // pred_region
          _
        $region28: #{tpu_custom_call.1} parent=11 // pred_fallthru
          _
        // Predicated region
        $region29: #{tpu_custom_call.1} parent=11 // pred_check
          %p428 = pneg %p291
        $region30: #{tpu_custom_call.1} parent=11 // pred_check_branch
          %430 = sbr.rel (%p428) target = $region32
        $region31: #{tpu_custom_call.1} parent=11 // pred_region
          _
        $region32: #{tpu_custom_call.1} parent=11 // pred_fallthru
          _
        // Predicated region
        $region33: #{tpu_custom_call.1} parent=11 // pred_check
          %p431 = pneg %p312
        $region34: #{tpu_custom_call.1} parent=11 // pred_check_branch
          %433 = sbr.rel (%p431) target = $region36
        $region35: #{tpu_custom_call.1} parent=11 // pred_region
          _
        $region36: #{tpu_custom_call.1} parent=11 // pred_fallthru
          _
      $region12: #{tpu_custom_call.1} parent=5 // pred_fallthru
        _
      %p434 = scmp.lt.s32.totalorder %s30, 2
      // Predicated region
      $region37: #{tpu_custom_call.1} parent=5 // pred_check
        %p435 = pneg %p434
      $region38: #{tpu_custom_call.1} parent=5 // pred_check_branch
        %437 = sbr.rel (%p435) target = $region40
      $region39: #{tpu_custom_call.1} parent=5 // pred_region
        // Predicated region
        $region41: #{tpu_custom_call.1} parent=39 // pred_check
          %p438 = pneg %p50
        $region42: #{tpu_custom_call.1} parent=39 // pred_check_branch
          %440 = sbr.rel (%p438) target = $region44
        $region43: #{tpu_custom_call.1} parent=39 // pred_region
          %s441 = smul.u32 2, %s30
          %p442 = scmp.lt.s32.totalorder %s441, 3
          %s443 = scalar_select %p442, %s441, 3
          %s444 = smul.addr %s443, 2
          %s445 = smul.addr %s444, 8
          %s446 = scalar_lea.vmem %s0, %s445
          %s447 = smul.u32 2, %s30
        $region44: #{tpu_custom_call.1} parent=39 // pred_fallthru
          _
        // Predicated region
        $region45: #{tpu_custom_call.1} parent=39 // pred_check
          %p448 = pneg %p76
        $region46: #{tpu_custom_call.1} parent=39 // pred_check_branch
          %450 = sbr.rel (%p448) target = $region48
        $region47: #{tpu_custom_call.1} parent=39 // pred_region
          %s451 = smul.u32 2, %s30
          %p452 = scmp.lt.s32.totalorder %s451, 3
          %s453 = scalar_select %p452, %s451, 3
          %s454 = scalar_lea.vmem %s1, %s453
          %s455 = smul.u32 2, %s30
        $region48: #{tpu_custom_call.1} parent=39 // pred_fallthru
          _
        // Predicated region
        $region49: #{tpu_custom_call.1} parent=39 // pred_check
          %p456 = pneg %p102
        $region50: #{tpu_custom_call.1} parent=39 // pred_check_branch
          %458 = sbr.rel (%p456) target = $region52
        $region51: #{tpu_custom_call.1} parent=39 // pred_region
          %s459 = smul.u32 2, %s30
          %p460 = scmp.lt.s32.totalorder %s459, 3
          %s461 = scalar_select %p460, %s459, 3
          %s462 = scalar_lea.vmem %s2, %s461
          %s463 = smul.u32 2, %s30
        $region52: #{tpu_custom_call.1} parent=39 // pred_fallthru
          _
        // Predicated region
        $region53: #{tpu_custom_call.1} parent=39 // pred_check
          %p464 = pneg %p128
        $region54: #{tpu_custom_call.1} parent=39 // pred_check_branch
          %466 = sbr.rel (%p464) target = $region56
        $region55: #{tpu_custom_call.1} parent=39 // pred_region
          %s467 = smul.u32 2, %s30
          %p468 = scmp.lt.s32.totalorder %s467, 3
          %s469 = scalar_select %p468, %s467, 3
          %s470 = smul.addr %s469, 8
          %s471 = scalar_lea.vmem %s3, %s470
          %s472 = smul.u32 2, %s30
        $region56: #{tpu_custom_call.1} parent=39 // pred_fallthru
          _
        // Predicated region
        $region57: #{tpu_custom_call.1} parent=39 // pred_check
          %p473 = pneg %p154
        $region58: #{tpu_custom_call.1} parent=39 // pred_check_branch
          %475 = sbr.rel (%p473) target = $region60
        $region59: #{tpu_custom_call.1} parent=39 // pred_region
          %s476 = smul.u32 2, %s30
          %p477 = scmp.lt.s32.totalorder %s476, 3
          %s478 = scalar_select %p477, %s476, 3
          %s479 = scalar_lea.vmem %s4, %s478
          %s480 = smul.u32 2, %s30
        $region60: #{tpu_custom_call.1} parent=39 // pred_fallthru
          _
        // Predicated region
        $region61: #{tpu_custom_call.1} parent=39 // pred_check
          %p481 = pneg %p180
        $region62: #{tpu_custom_call.1} parent=39 // pred_check_branch
          %483 = sbr.rel (%p481) target = $region64
        $region63: #{tpu_custom_call.1} parent=39 // pred_region
          %s484 = smul.u32 2, %s30
          %p485 = scmp.lt.s32.totalorder %s484, 3
          %s486 = scalar_select %p485, %s484, 3
          %s487 = scalar_lea.vmem %s5, %s486
          %s488 = smul.u32 2, %s30
        $region64: #{tpu_custom_call.1} parent=39 // pred_fallthru
          _
      $region40: #{tpu_custom_call.1} parent=5 // pred_fallthru
        _
      %p489 = scmp.le.s32.totalorder 1, %s30
      %p490 = scmp.lt.s32.totalorder %s30, 3
      %p491 = pnand %p489, %p490
      %p492 = pneg %p491
      // Predicated region
      $region65: #{tpu_custom_call.1} parent=5 // pred_check
        _
      $region66: #{tpu_custom_call.1} parent=5 // pred_check_branch
        %494 = sbr.rel (%p491) target = $region68
      $region67: #{tpu_custom_call.1} parent=5 // pred_region
        %s495 = ssub.s32 %s30, 1
        // Predicated region
        $region69: #{tpu_custom_call.1} parent=67 // pred_check
          %p496 = pneg %p249
        $region70: #{tpu_custom_call.1} parent=67 // pred_check_branch
          %498 = sbr.rel (%p496) target = $region72
        $region71: #{tpu_custom_call.1} parent=67 // pred_region
          %500 = dma.done [#allocation5], 4096
        $region72: #{tpu_custom_call.1} parent=67 // pred_fallthru
          _
        %s501 = smul.u32 2, %s35
        %p502 = scmp.lt.s32.totalorder %s501, 3
        %s503 = scalar_select %p502, %s501, 3
        %s504 = smul.addr %s503, 2
        %s505 = smul.addr %s504, 8
        %s506 = scalar_lea.vmem %s0, %s505
        %p507 = pneg %p56
        %p508 = pneg %p53
        %s509 = smul.u32 2, %s35
        %p510 = scmp.lt.s32.totalorder %s509, 3
        %s511 = scalar_select %p510, %s509, 3
        %s512 = scalar_lea.vmem %s1, %s511
        %p513 = pneg %p82
        %p514 = pneg %p79
        %s515 = smul.u32 2, %s35
        %p516 = scmp.lt.s32.totalorder %s515, 3
        %s517 = scalar_select %p516, %s515, 3
        %s518 = scalar_lea.vmem %s2, %s517
        %p519 = pneg %p108
        %p520 = pneg %p105
        %s521 = smul.u32 2, %s35
        %p522 = scmp.lt.s32.totalorder %s521, 3
        %s523 = scalar_select %p522, %s521, 3
        %s524 = smul.addr %s523, 8
        %s525 = scalar_lea.vmem %s3, %s524
        %p526 = pneg %p134
        %p527 = pneg %p131
        %s528 = smul.u32 2, %s35
        %p529 = scmp.lt.s32.totalorder %s528, 3
        %s530 = scalar_select %p529, %s528, 3
        %s531 = scalar_lea.vmem %s4, %s530
        %p532 = pneg %p160
        %p533 = pneg %p157
        %s534 = smul.u32 2, %s35
        %p535 = scmp.lt.s32.totalorder %s534, 3
        %s536 = scalar_select %p535, %s534, 3
        %s537 = scalar_lea.vmem %s5, %s536
        %p538 = pneg %p186
        %p539 = pneg %p183
        %p540 = pneg %p207
        %p541 = pneg %p204
        %p542 = pneg %p228
        %p543 = pneg %p225
        %p544 = pneg %p249
        %p545 = pneg %p246
        %p546 = pneg %p270
        %p547 = pneg %p267
        %p548 = pneg %p291
        %p549 = pneg %p288
        %p550 = pneg %p312
        %p551 = pneg %p309
        %p552 = pneg %p338
        %p553 = pneg %p335
        %s554 = smul.u32 2, %s35
        %p555 = scmp.lt.s32.totalorder %s554, 3
        %s556 = scalar_select %p555, %s554, 3
        %s557 = scalar_lea.vmem %s12, %s556
        %p558 = pneg %p364
        %p559 = pneg %p361
        %s560 = sand.u32 %s351, 1
        %s561 = scalar_lea.sflag [#allocation6], %s560
        %s562 = sand.u32 %s351, 1
        %s563 = smul.addr %s562, 32
        %s564 = scalar_lea.vmem [#allocation7], %s563
        %p565 = pneg %p390
        %p566 = pneg %p387
        %s567 = sand.u32 %s377, 1
        %s568 = scalar_lea.sflag [#allocation9], %s567
        %s569 = sand.u32 %s377, 1
        %s570 = smul.addr %s569, 2
        %s571 = scalar_lea.vmem [#allocation8], %s570
        %s572 = smul.u32 2, %s35
        %p573 = scmp.lt.s32.totalorder %s572, 3
        %s574 = scalar_select %p573, %s572, 3
        %s575 = smul.addr %s574, 2
        %s576 = smul.addr %s575, 8
        %s577 = scalar_lea.vmem %s0, %s576
        %s578 = smul.u32 2, %s35
        %s579 = smul.u32 2, %s35
        %p580 = scmp.lt.s32.totalorder %s579, 3
        %s581 = scalar_select %p580, %s579, 3
        %s582 = scalar_lea.vmem %s1, %s581
        %s583 = smul.u32 2, %s35
        %s584 = smul.u32 2, %s35
        %p585 = scmp.lt.s32.totalorder %s584, 3
        %s586 = scalar_select %p585, %s584, 3
        %s587 = scalar_lea.vmem %s2, %s586
        %s588 = smul.u32 2, %s35
        %s589 = smul.u32 2, %s35
        %p590 = scmp.lt.s32.totalorder %s589, 3
        %s591 = scalar_select %p590, %s589, 3
        %s592 = smul.addr %s591, 8
        %s593 = scalar_lea.vmem %s3, %s592
        %s594 = smul.u32 2, %s35
        %s595 = smul.u32 2, %s35
        %p596 = scmp.lt.s32.totalorder %s595, 3
        %s597 = scalar_select %p596, %s595, 3
        %s598 = scalar_lea.vmem %s4, %s597
        %s599 = smul.u32 2, %s35
        %s600 = smul.u32 2, %s35
        %p601 = scmp.lt.s32.totalorder %s600, 3
        %s602 = scalar_select %p601, %s600, 3
        %s603 = scalar_lea.vmem %s5, %s602
        %s604 = smul.u32 2, %s35
        %s605 = smul.u32 2, %s35
        %p606 = scmp.lt.s32.totalorder %s605, 3
        %s607 = scalar_select %p606, %s605, 3
        %s608 = scalar_lea.vmem %s12, %s607
        %s609 = smul.u32 2, %s35
        %s610 = smul.u32 2, %s35
        %s611 = smul.u32 2, %s35
        %v612 = vld [vmem:[%s577] sm:$0xff]
        %v613 = vld [vmem:[%s577 + $0x8] sm:$0xff]
        %v614 = vld [vmem:[%s577 + $0x10] sm:$0xff]
        %v615 = vld [vmem:[%s577 + $0x18] sm:$0xff]
        %v616 = vld [vmem:[%s582] sm:$0x1]
        %v617 = vld [vmem:[%s582 + $0x1] sm:$0x1]
        %v618 = vld [vmem:[%s587] sm:$0x1]
        %v619 = vld [vmem:[%s587 + $0x1] sm:$0x1]
        %v620 = vld [vmem:[%s593] sm:$0xff]
        %v621 = vld [vmem:[%s593 + $0x8] sm:$0xff]
        %v622 = vld [vmem:[%s598] sm:$0x1]
        %v623 = vld [vmem:[%s598 + $0x1] sm:$0x1]
        %v624 = vmul.f32 %v612, %v612
        %v625 = vmul.f32 %v613, %v613
        %v626 = vmul.f32 %v614, %v614
        %v627 = vmul.f32 %v615, %v615
        %v628 = vmul.f32 %v618, %v618
        %v629 = vmul.f32 %v619, %v619
        %v630 = vsub.f32 0.0, %v628
        %v631 = vsub.f32 0.0, %v629
        %v634 = vperm.slane %v630, 0
        %v635 = vperm.slane %v631, 0
        %v638 = vmul.f32 %v634, %v624
        %v639 = vmul.f32 %v634, %v625
        %v640 = vmul.f32 %v635, %v626
        %v641 = vmul.f32 %v635, %v627
        %v642 = vmul.f32 %v638, 1.442695
        %v643 = vpow.pop %v642
        %v644 = vmul.f32 %v639, 1.442695
        %v645 = vpow.pop %v644
        %v646 = vmul.f32 %v640, 1.442695
        %v647 = vpow.pop %v646
        %v648 = vmul.f32 %v641, 1.442695
        %v649 = vpow.pop %v648
        %v650 = vsub.f32 %v616, 1.0
        %v651 = vsub.f32 %v617, 1.0
        %v652 = vcvt.f32.s32.to.zero.pseudo %v650
        %v653 = vcvt.f32.s32.to.zero.pseudo %v651
        %v654 = vand.u32 %v652, 1
        %v655 = vand.u32 %v653, 1
        %vm656 = vcmp.eq.s32.totalorder %v654, 1
        %vm657 = vcmp.eq.s32.totalorder %v655, 1
        %v658 = vsel %vm656, 1, 0
        %v659 = vsel %vm657, 1, 0
        %v660 = vperm.slane %v658, 0
        %v661 = vperm.slane %v659, 0
        %vm662 = vcmp.eq.s32.totalorder %v660, 1
        %vm663 = vcmp.eq.s32.totalorder %v661, 1
        %v664 = vsel %vm662, %v612, 1.0
        %v665 = vsel %vm662, %v613, 1.0
        %v666 = vsel %vm663, %v614, 1.0
        %v667 = vsel %vm663, %v615, 1.0
        %v668 = vshra.s32 %v652, 1
        %v669 = vshra.s32 %v653, 1
        %v670 = vand.u32 %v668, 1
        %v671 = vand.u32 %v669, 1
        %vm672 = vcmp.eq.s32.totalorder %v670, 1
        %vm673 = vcmp.eq.s32.totalorder %v671, 1
        %v674 = vmul.f32 %v664, %v624
        %v675 = vmul.f32 %v665, %v625
        %v676 = vmul.f32 %v666, %v626
        %v677 = vmul.f32 %v667, %v627
        %v678 = vsel %vm672, 1, 0
        %v679 = vsel %vm673, 1, 0
        %v680 = vperm.slane %v678, 0
        %v681 = vperm.slane %v679, 0
        %vm682 = vcmp.eq.s32.totalorder %v680, 1
        %vm683 = vcmp.eq.s32.totalorder %v681, 1
        %v684 = vsel %vm682, %v674, %v664
        %v685 = vsel %vm682, %v675, %v665
        %v686 = vsel %vm683, %v676, %v666
        %v687 = vsel %vm683, %v677, %v667
        %v688 = vmul.f32 %v624, %v624
        %v689 = vmul.f32 %v625, %v625
        %v690 = vmul.f32 %v626, %v626
        %v691 = vmul.f32 %v627, %v627
        %v692 = vshra.s32 %v652, 2
        %v693 = vshra.s32 %v653, 2
        %v694 = vand.u32 %v692, 1
        %v695 = vand.u32 %v693, 1
        %vm696 = vcmp.eq.s32.totalorder %v694, 1
        %vm697 = vcmp.eq.s32.totalorder %v695, 1
        %v698 = vmul.f32 %v684, %v688
        %v699 = vmul.f32 %v685, %v689
        %v700 = vmul.f32 %v686, %v690
        %v701 = vmul.f32 %v687, %v691
        %v702 = vsel %vm696, 1, 0
        %v703 = vsel %vm697, 1, 0
        %v704 = vperm.slane %v702, 0
        %v705 = vperm.slane %v703, 0
        %vm706 = vcmp.eq.s32.totalorder %v704, 1
        %vm707 = vcmp.eq.s32.totalorder %v705, 1
        %v708 = vsel %vm706, %v698, %v684
        %v709 = vsel %vm706, %v699, %v685
        %v710 = vsel %vm707, %v700, %v686
        %v711 = vsel %vm707, %v701, %v687
        %v712 = vmul.f32 %v708, %v643
        %v713 = vmul.f32 %v709, %v645
        %v714 = vmul.f32 %v710, %v647
        %v715 = vmul.f32 %v711, %v649
        %v716 = vmul.f32 %v712, %v712
        %v717 = vmul.f32 %v713, %v713
        %v718 = vmul.f32 %v714, %v714
        %v719 = vmul.f32 %v715, %v715
        %vm720 = vcmask 64512
        %v721 = vsel %vm720, %v716, 0.0
        %v722 = vsel %vm720, %v717, 0.0
        %v723 = vadd.f32 %v721, %v722
        %v724 = vrot.slane %v723, 4
        %v725 = vadd.f32 %v723, %v724
        %v726 = vrot.slane %v725, 2
        %v727 = vadd.f32 %v725, %v726
        %v728 = vrot.slane %v727, 1
        %v729 = vadd.f32 %v727, %v728
        %v730 = vsel %vm720, %v718, 0.0
        %v731 = vsel %vm720, %v719, 0.0
        %v732 = vadd.f32 %v730, %v731
        %v733 = vrot.slane %v732, 4
        %v734 = vadd.f32 %v732, %v733
        %v735 = vrot.slane %v734, 2
        %v736 = vadd.f32 %v734, %v735
        %v737 = vrot.slane %v736, 1
        %v738 = vadd.f32 %v736, %v737
        %v739 = vmax.f32 %v729, 1e-24
        %v740 = vmax.f32 %v738, 1e-24
        %v741 = vrsqrt.pop %v739
        %v742 = vmul.f32 %v741, %v739
        %v743 = vmul.f32 %v742, %v741
        %v744 = vmul.f32 0.5, %v743
        %v745 = vsub.f32 1.5, %v744
        %v746 = vmul.f32 %v741, %v745
        %vm747 = vweird.f32 %v739
        %vm748 = vweird.f32 %v741
        %vm749 = vmor %vm747, %vm748
        %v750 = vsel %vm749, %v741, %v746
        %v751 = vrsqrt.pop %v740
        %v752 = vmul.f32 %v751, %v740
        %v753 = vmul.f32 %v752, %v751
        %v754 = vmul.f32 0.5, %v753
        %v755 = vsub.f32 1.5, %v754
        %v756 = vmul.f32 %v751, %v755
        %vm757 = vweird.f32 %v740
        %vm758 = vweird.f32 %v751
        %vm759 = vmor %vm757, %vm758
        %v760 = vsel %vm759, %v751, %v756
        %v761 = vmul.f32 %v712, %v750
        %v762 = vmul.f32 %v713, %v750
        %v763 = vmul.f32 %v714, %v760
        %v764 = vmul.f32 %v715, %v760
        %v765 = vmul.f32 %v628, 4.0
        %v766 = vmul.f32 %v629, 4.0
        %v767 = vmul.f32 %v765, %v628
        %v768 = vmul.f32 %v766, %v629
        %v771 = vperm.slane %v767, 0
        %v772 = vperm.slane %v768, 0
        %v775 = vmul.f32 %v771, %v624
        %v776 = vmul.f32 %v771, %v625
        %v777 = vmul.f32 %v772, %v626
        %v778 = vmul.f32 %v772, %v627
        %v779 = vmul.f32 %v775, %v624
        %v780 = vmul.f32 %v776, %v625
        %v781 = vmul.f32 %v777, %v626
        %v782 = vmul.f32 %v778, %v627
        %v783 = vmul.f32 %v628, 2.0
        %v784 = vmul.f32 %v629, 2.0
        %v785 = vmul.f32 %v616, 2.0
        %v786 = vmul.f32 %v617, 2.0
        %v787 = vadd.f32 %v785, 1.0
        %v788 = vadd.f32 %v786, 1.0
        %v789 = vmul.f32 %v783, %v787
        %v790 = vmul.f32 %v784, %v788
        %v793 = vperm.slane %v789, 0
        %v794 = vperm.slane %v790, 0
        %v797 = vmul.f32 %v793, %v624
        %v798 = vmul.f32 %v793, %v625
        %v799 = vmul.f32 %v794, %v626
        %v800 = vmul.f32 %v794, %v627
        %v801 = vsub.f32 %v779, %v797
        %v802 = vsub.f32 %v780, %v798
        %v803 = vsub.f32 %v781, %v799
        %v804 = vsub.f32 %v782, %v800
        %v805 = vmul.f32 %v616, %v650
        %v806 = vmul.f32 %v617, %v651
        %v809 = vperm.slane %v805, 0
        %v810 = vperm.slane %v806, 0
        %v813 = vadd.f32 %v801, %v809
        %v814 = vadd.f32 %v802, %v809
        %v815 = vadd.f32 %v803, %v810
        %v816 = vadd.f32 %v804, %v810
        %v817 = vmax.f32 %v624, 1e-24
        %v818 = vmax.f32 %v625, 1e-24
        %v819 = vmax.f32 %v626, 1e-24
        %v820 = vmax.f32 %v627, 1e-24
        %v821 = vrcp.pop %v817
        %v822 = vrcp.pop %v818
        %v823 = vrcp.pop %v819
        %v824 = vrcp.pop %v820
        %v825 = vmul.f32 %v708, %v821
        %v826 = vmul.f32 %v709, %v822
        %v827 = vmul.f32 %v710, %v823
        %v828 = vmul.f32 %v711, %v824
        %v829 = vmul.f32 %v825, %v643
        %v830 = vmul.f32 %v826, %v645
        %v831 = vmul.f32 %v827, %v647
        %v832 = vmul.f32 %v828, %v649
        %v833 = vmul.f32 %v829, %v813
        %v834 = vmul.f32 %v830, %v814
        %v835 = vmul.f32 %v831, %v815
        %v836 = vmul.f32 %v832, %v816
        %v837 = vmul.f32 %v833, %v750
        %v838 = vmul.f32 %v834, %v750
        %v839 = vmul.f32 %v835, %v760
        %v840 = vmul.f32 %v836, %v760
        %v841 = vmul.f32 %v620, %v620
        %v842 = vmul.f32 %v621, %v621
        %v843 = vrot.slane %v841, 4
        %v844 = vadd.f32 %v841, %v843
        %v845 = vrot.slane %v844, 2
        %v846 = vadd.f32 %v844, %v845
        %v847 = vrot.slane %v846, 1
        %v848 = vadd.f32 %v846, %v847
        %v849 = vrot.slane %v842, 4
        %v850 = vadd.f32 %v842, %v849
        %v851 = vrot.slane %v850, 2
        %v852 = vadd.f32 %v850, %v851
        %v853 = vrot.slane %v852, 1
        %v854 = vadd.f32 %v852, %v853
        %v855 = vmax.f32 %v848, 1e-24
        %v856 = vmax.f32 %v854, 1e-24
        %v857 = vrsqrt.pop %v855
        %v858 = vmul.f32 %v857, %v855
        %v859 = vmul.f32 %v858, %v857
        %v860 = vmul.f32 0.5, %v859
        %v861 = vsub.f32 1.5, %v860
        %v862 = vmul.f32 %v857, %v861
        %vm863 = vweird.f32 %v855
        %vm864 = vweird.f32 %v857
        %vm865 = vmor %vm863, %vm864
        %v866 = vsel %vm865, %v857, %v862
        %v867 = vrsqrt.pop %v856
        %v868 = vmul.f32 %v867, %v856
        %v869 = vmul.f32 %v868, %v867
        %v870 = vmul.f32 0.5, %v869
        %v871 = vsub.f32 1.5, %v870
        %v872 = vmul.f32 %v867, %v871
        %vm873 = vweird.f32 %v856
        %vm874 = vweird.f32 %v867
        %vm875 = vmor %vm873, %vm874
        %v876 = vsel %vm875, %v867, %v872
        %v877 = vmul.f32 %v620, %v866
        %v878 = vmul.f32 %v621, %v876
        %v880 = vsel %vm720, %v761, 0
        %v883 = vsel %vm720, %v762, 0
        %885 = vmatpush.msra.mxu0 0.0
        %886 = vmatpush.msra.mxu0 0.0
        %887 = vmatpush.msra.mxu0 0.0
        %888 = vmatpush.msra.mxu0 0.0
        %889 = vmatpush.msra.mxu0 0.0
        %890 = vmatpush.msra.mxu0 0.0
        %891 = vmatpush.msra.mxu0 0.0
        %892 = vmatpush.msra.mxu0 0.0
        %893 = vmatpush.msra.mxu0 0.0
        %894 = vmatpush.msra.mxu0 0.0
        %895 = vmatpush.msra.mxu0 0.0
        %896 = vmatpush.msra.mxu0 0.0
        %897 = vmatpush.msra.mxu0 0.0
        %898 = vmatpush.msra.mxu0 0.0
        %899 = vmatpush.msra.mxu0 0.0
        %900 = vmatpush.msra.mxu0 %v877
        %901 = vmatmul.f32.gmra.mxu0 %v880
        %v902 = vpop.f32.mrf.mxu0
        %v903 = vadd.f32 0.0, %v902
        %904 = vmatmul.f32.gmra.mxu0 %v883
        %v905 = vpop.f32.mrf.mxu0
        %v906 = vadd.f32 0.0, %v905
        %907 = vdwg.mxu0
        %v909 = vsel %vm720, %v763, 0
        %v912 = vsel %vm720, %v764, 0
        %914 = vmatpush.msra.mxu0 0.0
        %915 = vmatpush.msra.mxu0 0.0
        %916 = vmatpush.msra.mxu0 0.0
        %917 = vmatpush.msra.mxu0 0.0
        %918 = vmatpush.msra.mxu0 0.0
        %919 = vmatpush.msra.mxu0 0.0
        %920 = vmatpush.msra.mxu0 0.0
        %921 = vmatpush.msra.mxu0 0.0
        %922 = vmatpush.msra.mxu0 0.0
        %923 = vmatpush.msra.mxu0 0.0
        %924 = vmatpush.msra.mxu0 0.0
        %925 = vmatpush.msra.mxu0 0.0
        %926 = vmatpush.msra.mxu0 0.0
        %927 = vmatpush.msra.mxu0 0.0
        %928 = vmatpush.msra.mxu0 0.0
        %929 = vmatpush.msra.mxu0 %v878
        %930 = vmatmul.f32.gmra.mxu0 %v909
        %v931 = vpop.f32.mrf.mxu0
        %v932 = vadd.f32 0.0, %v931
        %933 = vmatmul.f32.gmra.mxu0 %v912
        %v934 = vpop.f32.mrf.mxu0
        %v935 = vadd.f32 0.0, %v934
        %936 = vdwg.mxu0
        %v938 = vsel %vm720, %v837, 0
        %v941 = vsel %vm720, %v838, 0
        %943 = vmatpush.msra.mxu0 0.0
        %944 = vmatpush.msra.mxu0 0.0
        %945 = vmatpush.msra.mxu0 0.0
        %946 = vmatpush.msra.mxu0 0.0
        %947 = vmatpush.msra.mxu0 0.0
        %948 = vmatpush.msra.mxu0 0.0
        %949 = vmatpush.msra.mxu0 0.0
        %950 = vmatpush.msra.mxu0 0.0
        %951 = vmatpush.msra.mxu0 0.0
        %952 = vmatpush.msra.mxu0 0.0
        %953 = vmatpush.msra.mxu0 0.0
        %954 = vmatpush.msra.mxu0 0.0
        %955 = vmatpush.msra.mxu0 0.0
        %956 = vmatpush.msra.mxu0 0.0
        %957 = vmatpush.msra.mxu0 0.0
        %958 = vmatpush.msra.mxu0 %v877
        %959 = vmatmul.f32.gmra.mxu0 %v938
        %v960 = vpop.f32.mrf.mxu0
        %v961 = vadd.f32 0.0, %v960
        %962 = vmatmul.f32.gmra.mxu0 %v941
        %v963 = vpop.f32.mrf.mxu0
        %v964 = vadd.f32 0.0, %v963
        %965 = vdwg.mxu0
        %v967 = vsel %vm720, %v839, 0
        %v970 = vsel %vm720, %v840, 0
        %972 = vmatpush.msra.mxu0 0.0
        %973 = vmatpush.msra.mxu0 0.0
        %974 = vmatpush.msra.mxu0 0.0
        %975 = vmatpush.msra.mxu0 0.0
        %976 = vmatpush.msra.mxu0 0.0
        %977 = vmatpush.msra.mxu0 0.0
        %978 = vmatpush.msra.mxu0 0.0
        %979 = vmatpush.msra.mxu0 0.0
        %980 = vmatpush.msra.mxu0 0.0
        %981 = vmatpush.msra.mxu0 0.0
        %982 = vmatpush.msra.mxu0 0.0
        %983 = vmatpush.msra.mxu0 0.0
        %984 = vmatpush.msra.mxu0 0.0
        %985 = vmatpush.msra.mxu0 0.0
        %986 = vmatpush.msra.mxu0 0.0
        %987 = vmatpush.msra.mxu0 %v878
        %988 = vmatmul.f32.gmra.mxu0 %v967
        %v989 = vpop.f32.mrf.mxu0
        %v990 = vadd.f32 0.0, %v989
        %991 = vmatmul.f32.gmra.mxu0 %v970
        %v992 = vpop.f32.mrf.mxu0
        %v993 = vadd.f32 0.0, %v992
        %994 = vdwg.mxu0
        %v995 = vmul.f32 %v903, %v903
        %v996 = vmul.f32 %v906, %v906
        %v997 = vmul.f32 %v932, %v932
        %v998 = vmul.f32 %v935, %v935
        %v999 = vadd.f32 %v995, %v996
        %v1000 = vrot.slane %v999, 4
        %v1001 = vadd.f32 %v999, %v1000
        %v1002 = vrot.slane %v1001, 2
        %v1003 = vadd.f32 %v1001, %v1002
        %v1004 = vrot.slane %v1003, 1
        %v1005 = vadd.f32 %v1003, %v1004
        %v1006 = vadd.f32 %v997, %v998
        %v1007 = vrot.slane %v1006, 4
        %v1008 = vadd.f32 %v1006, %v1007
        %v1009 = vrot.slane %v1008, 2
        %v1010 = vadd.f32 %v1008, %v1009
        %v1011 = vrot.slane %v1010, 1
        %v1012 = vadd.f32 %v1010, %v1011
        %v1013 = vmax.f32 %v1005, 1e-24
        %v1014 = vmax.f32 %v1012, 1e-24
        %v1015 = vrsqrt.pop %v1013
        %v1016 = vmul.f32 %v1015, %v1013
        %v1017 = vmul.f32 %v1016, %v1015
        %v1018 = vmul.f32 0.5, %v1017
        %v1019 = vsub.f32 1.5, %v1018
        %v1020 = vmul.f32 %v1015, %v1019
        %vm1021 = vweird.f32 %v1013
        %vm1022 = vweird.f32 %v1015
        %vm1023 = vmor %vm1021, %vm1022
        %v1024 = vsel %vm1023, %v1015, %v1020
        %v1025 = vrsqrt.pop %v1014
        %v1026 = vmul.f32 %v1025, %v1014
        %v1027 = vmul.f32 %v1026, %v1025
        %v1028 = vmul.f32 0.5, %v1027
        %v1029 = vsub.f32 1.5, %v1028
        %v1030 = vmul.f32 %v1025, %v1029
        %vm1031 = vweird.f32 %v1014
        %vm1032 = vweird.f32 %v1025
        %vm1033 = vmor %vm1031, %vm1032
        %v1034 = vsel %vm1033, %v1025, %v1030
        %v1035 = vmul.f32 %v1024, %v1024
        %v1036 = vmul.f32 %v1034, %v1034
        %1038 = vset.pattern.permute.xlu0 0
        %1039 = vperm.xlu0 %1038, %v622
        %v1040 = vpop.permute.xlu0 %1039
        %v1042 = vperm.slane %v1040, 0
        %1044 = vset.pattern.permute.xlu0 0
        %1045 = vperm.xlu0 %1044, %v623
        %v1046 = vpop.permute.xlu0 %1045
        %v1048 = vperm.slane %v1046, 0
        %v1049 = vmul.f32 %v1042, %v1035
        %v1050 = vmul.f32 %v1048, %v1036
        %v1051 = vmul.f32 %v1049, 0.03125
        %v1052 = vmul.f32 %v1050, 0.03125
        %v1053 = vrsqrt.pop %v1051
        %v1054 = vmul.f32 %v1053, %v1051
        %v1055 = vmul.f32 %v1054, %v1053
        %v1056 = vmul.f32 0.5, %v1055
        %v1057 = vsub.f32 1.5, %v1056
        %v1058 = vmul.f32 %v1053, %v1057
        %v1059 = vmul.f32 %v1051, %v1058
        %vm1060 = vcmp.eq.f32.partialorder %v1051, inf
        %v1061 = vsel %vm1060, %v1051, %v1059
        %vm1062 = vcmp.eq.f32.partialorder %v1051, 0.0
        %v1063 = vand.u32 %v1051, 2147483648
        %v1064 = vsel %vm1062, %v1063, %v1061
        %v1065 = vrsqrt.pop %v1052
        %v1066 = vmul.f32 %v1065, %v1052
        %v1067 = vmul.f32 %v1066, %v1065
        %v1068 = vmul.f32 0.5, %v1067
        %v1069 = vsub.f32 1.5, %v1068
        %v1070 = vmul.f32 %v1065, %v1069
        %v1071 = vmul.f32 %v1052, %v1070
        %vm1072 = vcmp.eq.f32.partialorder %v1052, inf
        %v1073 = vsel %vm1072, %v1052, %v1071
        %vm1074 = vcmp.eq.f32.partialorder %v1052, 0.0
        %v1075 = vand.u32 %v1052, 2147483648
        %v1076 = vsel %vm1074, %v1075, %v1073
        %v1077 = vmul.f32 %v903, %v1064
        %v1078 = vmul.f32 %v906, %v1064
        %v1079 = vmul.f32 %v932, %v1076
        %v1080 = vmul.f32 %v935, %v1076
        %1081 = vst [vmem:[%s564] sm:$0xff] %v1077
        %1082 = vst [vmem:[%s564 + $0x8] sm:$0xff] %v1078
        %1083 = vst [vmem:[%s564 + $0x10] sm:$0xff] %v1079
        %1084 = vst [vmem:[%s564 + $0x18] sm:$0xff] %v1080
        %v1085 = vmul.f32 %v1077, %v1077
        %v1086 = vmul.f32 %v1078, %v1078
        %v1087 = vmul.f32 %v1079, %v1079
        %v1088 = vmul.f32 %v1080, %v1080
        %1089 = vadd.xlane.f32.xlu0 %v1085
        %v1090 = vpop.xlane.xlu0 %1089
        %1091 = vadd.xlane.f32.xlu0 %v1086
        %v1092 = vpop.xlane.xlu0 %1091
        %1093 = vadd.xlane.f32.xlu0 %v1087
        %v1094 = vpop.xlane.xlu0 %1093
        %1095 = vadd.xlane.f32.xlu0 %v1088
        %v1096 = vpop.xlane.xlu0 %1095
        %v1101 = vlaneseq
        %v1102 = vand.u32 %v1101, 127
        %v1103 = vperm.slane %v1090, %v1102
        %v1104 = vadd.s32 %v1102, 4294967288
        %v1105 = vperm.slane %v1092, %v1104
        %vm1106 = vcmask 130112
        %v1107 = vsel %vm1106, %v1105, %v1103
        %v1108 = vperm.slane %v1094, %v1102
        %v1109 = vperm.slane %v1096, %v1104
        %v1110 = vsel %vm1106, %v1109, %v1108
        %vm1113 = vcmask 122880
        %1114 = vst.msk [vmem:[%s571] sm:$0x1] %vm1113, %v1107
        %1115 = vst.msk [vmem:[%s571 + $0x1] sm:$0x1] %vm1113, %v1110
        %v1116 = vld [vmem:[%s603] sm:$0x1]
        %v1117 = vld [vmem:[%s603 + $0x1] sm:$0x1]
        %v1118 = vperm.slane %v1090, 0
        %v1119 = vperm.slane %v1090, 1
        %v1120 = vperm.slane %v1090, 2
        %v1121 = vperm.slane %v1090, 3
        %v1122 = vperm.slane %v1090, 4
        %v1123 = vperm.slane %v1090, 5
        %v1124 = vperm.slane %v1090, 6
        %v1125 = vperm.slane %v1090, 7
        %v1126 = vperm.slane %v1092, 0
        %v1127 = vperm.slane %v1092, 1
        %v1128 = vperm.slane %v1092, 2
        %v1129 = vperm.slane %v1092, 3
        %v1130 = vperm.slane %v1092, 4
        %v1131 = vperm.slane %v1092, 5
        %v1132 = vperm.slane %v1092, 6
        %v1133 = vperm.slane %v1092, 7
        %v1134 = vperm.slane %v1094, 0
        %v1135 = vperm.slane %v1094, 1
        %v1136 = vperm.slane %v1094, 2
        %v1137 = vperm.slane %v1094, 3
        %v1138 = vperm.slane %v1094, 4
        %v1139 = vperm.slane %v1094, 5
        %v1140 = vperm.slane %v1094, 6
        %v1141 = vperm.slane %v1094, 7
        %v1142 = vperm.slane %v1096, 0
        %v1143 = vperm.slane %v1096, 1
        %v1144 = vperm.slane %v1096, 2
        %v1145 = vperm.slane %v1096, 3
        %v1146 = vperm.slane %v1096, 4
        %v1147 = vperm.slane %v1096, 5
        %v1148 = vperm.slane %v1096, 6
        %v1149 = vperm.slane %v1096, 7
        %1150 = vst [vmem:[#allocation1] ss:$9 sm:$0xff] %v1118
        %s1151 = scalar_lea.vmem [#allocation1], 1
        %1152 = vst [vmem:[%s1151] ss:$9 sm:$0xff] %v1119
        %s1153 = scalar_lea.vmem [#allocation1], 2
        %1154 = vst [vmem:[%s1153] ss:$9 sm:$0xff] %v1120
        %s1155 = scalar_lea.vmem [#allocation1], 3
        %1156 = vst [vmem:[%s1155] ss:$9 sm:$0xff] %v1121
        %s1157 = scalar_lea.vmem [#allocation1], 4
        %1158 = vst [vmem:[%s1157] ss:$9 sm:$0xff] %v1122
        %s1159 = scalar_lea.vmem [#allocation1], 5
        %1160 = vst [vmem:[%s1159] ss:$9 sm:$0xff] %v1123
        %s1161 = scalar_lea.vmem [#allocation1], 6
        %1162 = vst [vmem:[%s1161] ss:$9 sm:$0xff] %v1124
        %s1163 = scalar_lea.vmem [#allocation1], 7
        %1164 = vst [vmem:[%s1163] ss:$9 sm:$0xff] %v1125
        %v1165 = vld [vmem:[#allocation1] sm:$0xff]
        %1166 = vst [vmem:[#allocation1] ss:$9 sm:$0xff] %v1126
        %1167 = vst [vmem:[%s1151] ss:$9 sm:$0xff] %v1127
        %1168 = vst [vmem:[%s1153] ss:$9 sm:$0xff] %v1128
        %1169 = vst [vmem:[%s1155] ss:$9 sm:$0xff] %v1129
        %1170 = vst [vmem:[%s1157] ss:$9 sm:$0xff] %v1130
        %1171 = vst [vmem:[%s1159] ss:$9 sm:$0xff] %v1131
        %1172 = vst [vmem:[%s1161] ss:$9 sm:$0xff] %v1132
        %1173 = vst [vmem:[%s1163] ss:$9 sm:$0xff] %v1133
        %v1174 = vld [vmem:[#allocation1] sm:$0xff]
        %1175 = vst [vmem:[#allocation1] ss:$9 sm:$0xff] %v1134
        %1176 = vst [vmem:[%s1151] ss:$9 sm:$0xff] %v1135
        %1177 = vst [vmem:[%s1153] ss:$9 sm:$0xff] %v1136
        %1178 = vst [vmem:[%s1155] ss:$9 sm:$0xff] %v1137
        %1179 = vst [vmem:[%s1157] ss:$9 sm:$0xff] %v1138
        %1180 = vst [vmem:[%s1159] ss:$9 sm:$0xff] %v1139
        %1181 = vst [vmem:[%s1161] ss:$9 sm:$0xff] %v1140
        %1182 = vst [vmem:[%s1163] ss:$9 sm:$0xff] %v1141
        %v1183 = vld [vmem:[#allocation1] sm:$0xff]
        %1184 = vst [vmem:[#allocation1] ss:$9 sm:$0xff] %v1142
        %1185 = vst [vmem:[%s1151] ss:$9 sm:$0xff] %v1143
        %1186 = vst [vmem:[%s1153] ss:$9 sm:$0xff] %v1144
        %1187 = vst [vmem:[%s1155] ss:$9 sm:$0xff] %v1145
        %1188 = vst [vmem:[%s1157] ss:$9 sm:$0xff] %v1146
        %1189 = vst [vmem:[%s1159] ss:$9 sm:$0xff] %v1147
        %1190 = vst [vmem:[%s1161] ss:$9 sm:$0xff] %v1148
        %1191 = vst [vmem:[%s1163] ss:$9 sm:$0xff] %v1149
        %v1192 = vld [vmem:[#allocation1] sm:$0xff]
        %1193 = vset.pattern.permute.xlu0 0
        %1194 = vperm.xlu0 %1193, %v1165
        %v1195 = vpop.permute.xlu0 %1194
        %1196 = vset.pattern.permute.xlu0 0
        %1197 = vperm.xlu0 %1196, %v1174
        %v1198 = vpop.permute.xlu0 %1197
        %1199 = vset.pattern.permute.xlu0 0
        %1200 = vperm.xlu0 %1199, %v1183
        %v1201 = vpop.permute.xlu0 %1200
        %1202 = vset.pattern.permute.xlu0 0
        %1203 = vperm.xlu0 %1202, %v1192
        %v1204 = vpop.permute.xlu0 %1203
        %v1205 = vperm.slane %v1195, %v1102
        %v1206 = vperm.slane %v1198, %v1104
        %v1207 = vsel %vm1106, %v1206, %v1205
        %v1208 = vperm.slane %v1201, %v1102
        %v1209 = vperm.slane %v1204, %v1104
        %v1210 = vsel %vm1106, %v1209, %v1208
        %v1213 = vmul.f32 %v1116, %v1207
        %v1214 = vmul.f32 %v1117, %v1210
        %1217 = vst [vmem:[#allocation1] ss:$9 sm:$0xff] %v1213
        %s1218 = scalar_lea.vmem [#allocation1], 1
        %1219 = vst [vmem:[%s1218] ss:$9 sm:$0xff] %v1214
        %v1220 = vld [vmem:[#allocation1] sm:$0xff]
        %vm1222 = vcmask 123904
        %v1223 = vsel %vm1222, %v1220, 0.0
        %1224 = vadd.xlane.f32.xlu0 %v1223
        %v1225 = vpop.xlane.xlu0 %1224
        %v1226 = vmul.f32 %v903, %v961
        %v1227 = vmul.f32 %v906, %v964
        %v1228 = vmul.f32 %v932, %v990
        %v1229 = vmul.f32 %v935, %v993
        %v1230 = vadd.f32 %v1226, %v1227
        %v1231 = vrot.slane %v1230, 4
        %v1232 = vadd.f32 %v1230, %v1231
        %v1233 = vrot.slane %v1232, 2
        %v1234 = vadd.f32 %v1232, %v1233
        %v1235 = vrot.slane %v1234, 1
        %v1236 = vadd.f32 %v1234, %v1235
        %v1237 = vadd.f32 %v1228, %v1229
        %v1238 = vrot.slane %v1237, 4
        %v1239 = vadd.f32 %v1237, %v1238
        %v1240 = vrot.slane %v1239, 2
        %v1241 = vadd.f32 %v1239, %v1240
        %v1242 = vrot.slane %v1241, 1
        %v1243 = vadd.f32 %v1241, %v1242
        %v1244 = vmul.f32 %v1236, %v1051
        %v1245 = vmul.f32 %v1243, %v1052
        %vm1248 = vcmask 1041409
        %v1249 = vsel %vm1248, %v1245, %v1244
        %vm1251 = vcmask 1041408
        %v1252 = vsel %vm1251, %v1249, 0.0
        %1253 = vadd.xlane.f32.xlu0 %v1252
        %v1254 = vpop.xlane.xlu0 %1253
        %v1255 = vmul.f32 %v1254, 0.5
        %v1256 = vld [vmem:[%s6] sm:$0x1]
        %v1257 = vld [vmem:[%s7] sm:$0x1]
        %v1259 = vperm.slane %v1256, 0
        %v1261 = vmul.f32 %v1090, %v1259
        %v1262 = vmul.f32 %v1092, %v1259
        %v1263 = vmul.f32 %v1094, %v1259
        %v1264 = vmul.f32 %v1096, %v1259
        %v1266 = vperm.slane %v1257, 0
        %v1268 = vadd.f32 %v1261, %v1266
        %v1269 = vadd.f32 %v1262, %v1266
        %v1270 = vadd.f32 %v1263, %v1266
        %v1271 = vadd.f32 %v1264, %v1266
        %1272 = vst [vmem:[#allocation2] sm:$0xff] %v1268
        %1273 = vst [vmem:[#allocation2 + $0x8] sm:$0xff] %v1269
        %1274 = vst [vmem:[#allocation2 + $0x10] sm:$0xff] %v1270
        %1275 = vst [vmem:[#allocation2 + $0x18] sm:$0xff] %v1271
        %v1276 = vld [vmem:[#allocation2] sm:$0xff]
        %v1277 = vld [vmem:[#allocation2 + $0x8] sm:$0xff]
        %v1278 = vld [vmem:[#allocation2 + $0x10] sm:$0xff]
        %v1279 = vld [vmem:[#allocation2 + $0x18] sm:$0xff]
        %v1280 = vld [vmem:[#allocation4] sm:$0xff]
        %v1281 = vld [vmem:[#allocation4 + $0x8] sm:$0xff]
        %v1282 = vld [vmem:[#allocation4 + $0x10] sm:$0xff]
        %v1283 = vld [vmem:[#allocation4 + $0x18] sm:$0xff]
        %v1284 = vld [vmem:[#allocation4 + $0x20] sm:$0xff]
        %v1285 = vld [vmem:[#allocation4 + $0x28] sm:$0xff]
        %v1286 = vld [vmem:[#allocation4 + $0x30] sm:$0xff]
        %v1287 = vld [vmem:[#allocation4 + $0x38] sm:$0xff]
        %v1288 = vld [vmem:[#allocation4 + $0x40] sm:$0xff]
        %v1289 = vld [vmem:[#allocation4 + $0x48] sm:$0xff]
        %v1290 = vld [vmem:[#allocation4 + $0x50] sm:$0xff]
        %v1291 = vld [vmem:[#allocation4 + $0x58] sm:$0xff]
        %v1292 = vld [vmem:[#allocation4 + $0x60] sm:$0xff]
        %v1293 = vld [vmem:[#allocation4 + $0x68] sm:$0xff]
        %v1294 = vld [vmem:[#allocation4 + $0x70] sm:$0xff]
        %v1295 = vld [vmem:[#allocation4 + $0x78] sm:$0xff]
        %v1296 = vld [vmem:[%s9] sm:$0x1]
        %v1298 = vperm.slane %v1296, 0
        %1300 = vmatpush.msra.mxu0 %v1295
        %1301 = vmatpush.msra.mxu0 %v1294
        %1302 = vmatpush.msra.mxu0 %v1293
        %1303 = vmatpush.msra.mxu0 %v1292
        %1304 = vmatpush.msra.mxu0 %v1291
        %1305 = vmatpush.msra.mxu0 %v1290
        %1306 = vmatpush.msra.mxu0 %v1289
        %1307 = vmatpush.msra.mxu0 %v1288
        %1308 = vmatpush.msra.mxu0 %v1287
        %1309 = vmatpush.msra.mxu0 %v1286
        %1310 = vmatpush.msra.mxu0 %v1285
        %1311 = vmatpush.msra.mxu0 %v1284
        %1312 = vmatpush.msra.mxu0 %v1283
        %1313 = vmatpush.msra.mxu0 %v1282
        %1314 = vmatpush.msra.mxu0 %v1281
        %1315 = vmatpush.msra.mxu0 %v1280
        %1316 = vmatmul.f32.gmra.mxu0 %v1276
        %v1317 = vpop.f32.mrf.mxu0
        %v1318 = vadd.f32 %v1298, %v1317
        %1319 = vmatmul.f32.gmra.mxu0 %v1277
        %v1320 = vpop.f32.mrf.mxu0
        %v1321 = vadd.f32 %v1298, %v1320
        %1322 = vmatmul.f32.gmra.mxu0 %v1278
        %v1323 = vpop.f32.mrf.mxu0
        %v1324 = vadd.f32 %v1298, %v1323
        %1325 = vmatmul.f32.gmra.mxu0 %v1279
        %v1326 = vpop.f32.mrf.mxu0
        %v1327 = vadd.f32 %v1298, %v1326
        %1328 = vdwg.mxu0
        %v1329 = vmax.f32 %v1318, 0.0
        %v1330 = vmax.f32 %v1321, 0.0
        %v1331 = vmax.f32 %v1324, 0.0
        %v1332 = vmax.f32 %v1327, 0.0
        %1333 = vst [vmem:[#allocation2] sm:$0xff] %v1329
        %1334 = vst [vmem:[#allocation2 + $0x8] sm:$0xff] %v1330
        %1335 = vst [vmem:[#allocation2 + $0x10] sm:$0xff] %v1331
        %1336 = vst [vmem:[#allocation2 + $0x18] sm:$0xff] %v1332
        %v1337 = vld [vmem:[#allocation2] sm:$0xff]
        %v1338 = vld [vmem:[#allocation2 + $0x8] sm:$0xff]
        %v1339 = vld [vmem:[#allocation2 + $0x10] sm:$0xff]
        %v1340 = vld [vmem:[#allocation2 + $0x18] sm:$0xff]
        %s1341 = scalar_lea.vmem [#allocation4], 128
        %v1342 = vld [vmem:[%s1341] sm:$0xff]
        %v1343 = vld [vmem:[%s1341 + $0x8] sm:$0xff]
        %v1344 = vld [vmem:[%s1341 + $0x10] sm:$0xff]
        %v1345 = vld [vmem:[%s1341 + $0x18] sm:$0xff]
        %v1346 = vld [vmem:[%s1341 + $0x20] sm:$0xff]
        %v1347 = vld [vmem:[%s1341 + $0x28] sm:$0xff]
        %v1348 = vld [vmem:[%s1341 + $0x30] sm:$0xff]
        %v1349 = vld [vmem:[%s1341 + $0x38] sm:$0xff]
        %v1350 = vld [vmem:[%s1341 + $0x40] sm:$0xff]
        %v1351 = vld [vmem:[%s1341 + $0x48] sm:$0xff]
        %v1352 = vld [vmem:[%s1341 + $0x50] sm:$0xff]
        %v1353 = vld [vmem:[%s1341 + $0x58] sm:$0xff]
        %v1354 = vld [vmem:[%s1341 + $0x60] sm:$0xff]
        %v1355 = vld [vmem:[%s1341 + $0x68] sm:$0xff]
        %v1356 = vld [vmem:[%s1341 + $0x70] sm:$0xff]
        %v1357 = vld [vmem:[%s1341 + $0x78] sm:$0xff]
        %s1358 = scalar_lea.vmem %s9, 1
        %v1359 = vld [vmem:[%s1358] sm:$0x1]
        %v1361 = vperm.slane %v1359, 0
        %1363 = vmatpush.msra.mxu0 %v1357
        %1364 = vmatpush.msra.mxu0 %v1356
        %1365 = vmatpush.msra.mxu0 %v1355
        %1366 = vmatpush.msra.mxu0 %v1354
        %1367 = vmatpush.msra.mxu0 %v1353
        %1368 = vmatpush.msra.mxu0 %v1352
        %1369 = vmatpush.msra.mxu0 %v1351
        %1370 = vmatpush.msra.mxu0 %v1350
        %1371 = vmatpush.msra.mxu0 %v1349
        %1372 = vmatpush.msra.mxu0 %v1348
        %1373 = vmatpush.msra.mxu0 %v1347
        %1374 = vmatpush.msra.mxu0 %v1346
        %1375 = vmatpush.msra.mxu0 %v1345
        %1376 = vmatpush.msra.mxu0 %v1344
        %1377 = vmatpush.msra.mxu0 %v1343
        %1378 = vmatpush.msra.mxu0 %v1342
        %1379 = vmatmul.f32.gmra.mxu0 %v1337
        %v1380 = vpop.f32.mrf.mxu0
        %v1381 = vadd.f32 %v1361, %v1380
        %1382 = vmatmul.f32.gmra.mxu0 %v1338
        %v1383 = vpop.f32.mrf.mxu0
        %v1384 = vadd.f32 %v1361, %v1383
        %1385 = vmatmul.f32.gmra.mxu0 %v1339
        %v1386 = vpop.f32.mrf.mxu0
        %v1387 = vadd.f32 %v1361, %v1386
        %1388 = vmatmul.f32.gmra.mxu0 %v1340
        %v1389 = vpop.f32.mrf.mxu0
        %v1390 = vadd.f32 %v1361, %v1389
        %1391 = vdwg.mxu0
        %v1392 = vmax.f32 %v1381, 0.0
        %v1393 = vmax.f32 %v1384, 0.0
        %v1394 = vmax.f32 %v1387, 0.0
        %v1395 = vmax.f32 %v1390, 0.0
        %1396 = vst [vmem:[#allocation2] sm:$0xff] %v1392
        %1397 = vst [vmem:[#allocation2 + $0x8] sm:$0xff] %v1393
        %1398 = vst [vmem:[#allocation2 + $0x10] sm:$0xff] %v1394
        %1399 = vst [vmem:[#allocation2 + $0x18] sm:$0xff] %v1395
        %v1400 = vld [vmem:[#allocation2] sm:$0xff]
        %v1401 = vld [vmem:[#allocation2 + $0x8] sm:$0xff]
        %v1402 = vld [vmem:[#allocation2 + $0x10] sm:$0xff]
        %v1403 = vld [vmem:[#allocation2 + $0x18] sm:$0xff]
        %v1404 = vadd.f32 %v1400, %v1401
        %v1405 = vrot.slane %v1404, 4
        %v1406 = vadd.f32 %v1404, %v1405
        %v1407 = vrot.slane %v1406, 2
        %v1408 = vadd.f32 %v1406, %v1407
        %v1409 = vrot.slane %v1408, 1
        %v1410 = vadd.f32 %v1408, %v1409
        %v1411 = vadd.f32 %v1402, %v1403
        %v1412 = vrot.slane %v1411, 4
        %v1413 = vadd.f32 %v1411, %v1412
        %v1414 = vrot.slane %v1413, 2
        %v1415 = vadd.f32 %v1413, %v1414
        %v1416 = vrot.slane %v1415, 1
        %v1417 = vadd.f32 %v1415, %v1416
        %v1418 = vld [vmem:[%s10] sm:$0xff]
        %v1419 = vld [vmem:[%s10 + $0x8] sm:$0xff]
        %v1420 = vld [vmem:[%s10 + $0x10] sm:$0xff]
        %v1421 = vld [vmem:[%s10 + $0x18] sm:$0xff]
        %v1422 = vld [vmem:[%s10 + $0x20] sm:$0xff]
        %v1423 = vld [vmem:[%s10 + $0x28] sm:$0xff]
        %v1424 = vld [vmem:[%s10 + $0x30] sm:$0xff]
        %v1425 = vld [vmem:[%s10 + $0x38] sm:$0xff]
        %v1426 = vld [vmem:[%s10 + $0x40] sm:$0xff]
        %v1427 = vld [vmem:[%s10 + $0x48] sm:$0xff]
        %v1428 = vld [vmem:[%s10 + $0x50] sm:$0xff]
        %v1429 = vld [vmem:[%s10 + $0x58] sm:$0xff]
        %v1430 = vld [vmem:[%s10 + $0x60] sm:$0xff]
        %v1431 = vld [vmem:[%s10 + $0x68] sm:$0xff]
        %v1432 = vld [vmem:[%s10 + $0x70] sm:$0xff]
        %v1433 = vld [vmem:[%s10 + $0x78] sm:$0xff]
        %v1434 = vld [vmem:[#allocation3] sm:$0x1]
        %v1436 = vperm.slane %v1434, 0
        %v1440 = vsel %vm1248, %v1417, %v1410
        %1442 = vmatpush.msra.mxu0 %v1433
        %1443 = vmatpush.msra.mxu0 %v1432
        %1444 = vmatpush.msra.mxu0 %v1431
        %1445 = vmatpush.msra.mxu0 %v1430
        %1446 = vmatpush.msra.mxu0 %v1429
        %1447 = vmatpush.msra.mxu0 %v1428
        %1448 = vmatpush.msra.mxu0 %v1427
        %1449 = vmatpush.msra.mxu0 %v1426
        %1450 = vmatpush.msra.mxu0 %v1425
        %1451 = vmatpush.msra.mxu0 %v1424
        %1452 = vmatpush.msra.mxu0 %v1423
        %1453 = vmatpush.msra.mxu0 %v1422
        %1454 = vmatpush.msra.mxu0 %v1421
        %1455 = vmatpush.msra.mxu0 %v1420
        %1456 = vmatpush.msra.mxu0 %v1419
        %1457 = vmatpush.msra.mxu0 %v1418
        %1458 = vmatmul.f32.gmra.mxu0 %v1440
        %v1459 = vpop.f32.mrf.mxu0
        %v1460 = vadd.f32 %v1436, %v1459
        %1461 = vdwg.mxu0
        %v1462 = vadd.f32 %v1460, %v1225
        %v1463 = vsub.f32 %v1462, %v1255
        %v1465 = vrot.slane %v1463, 1
        %vm1467 = vcmask 0
        %1468 = vst.msk [vmem:[%s608] sm:$0x1] %vm1467, %v1463
        %1469 = vst.msk [vmem:[%s608 + $0x1] sm:$0x1] %vm1467, %v1465
        %v1471 = vrot.slane %v1460, 1
        %v1472 = vperm.slane %v1460, 0
        %v1473 = vperm.slane %v1471, 0
        %1474 = vrot.lane.b32.xlu0 %v1472, 1
        %v1475 = vpop.permute.xlu0 %1474
        %1476 = vrot.lane.b32.xlu0 %v1473, 1
        %v1477 = vpop.permute.xlu0 %1476
        %vm1480 = vcmask 8200
        %1481 = vst.msk [vmem:[%s608] sm:$0x1] %vm1480, %v1475
        %1482 = vst.msk [vmem:[%s608 + $0x1] sm:$0x1] %vm1480, %v1477
        %s1483 = smul.u32 2, %s35
        %p1484 = scmp.lt.s32.totalorder %s1483, 3
        %s1485 = scalar_select %p1484, %s1483, 3
        %s1486 = scalar_lea.vmem %s12, %s1485
        %s1487 = sand.u32 %s351, 1
        %s1488 = scalar_lea.sflag [#allocation6], %s1487
        %s1489 = sand.u32 %s351, 1
        %s1490 = smul.addr %s1489, 32
        %s1491 = scalar_lea.vmem [#allocation7], %s1490
        %s1492 = sand.u32 %s377, 1
        %s1493 = scalar_lea.sflag [#allocation9], %s1492
        %s1494 = sand.u32 %s377, 1
        %s1495 = smul.addr %s1494, 2
        %s1496 = scalar_lea.vmem [#allocation8], %s1495
        // Predicated region
        $region73: #{tpu_custom_call.1} parent=67 // pred_check
          %p1497 = pneg %p335
        $region74: #{tpu_custom_call.1} parent=67 // pred_check_branch
          %1499 = sbr.rel (%p1497) target = $region76
        $region75: #{tpu_custom_call.1} parent=67 // pred_region
          %s1500 = smul.u32 2, %s35
        $region76: #{tpu_custom_call.1} parent=67 // pred_fallthru
          _
        // Predicated region
        $region77: #{tpu_custom_call.1} parent=67 // pred_check
          %p1501 = pneg %p361
        $region78: #{tpu_custom_call.1} parent=67 // pred_check_branch
          %1503 = sbr.rel (%p1501) target = $region80
        $region79: #{tpu_custom_call.1} parent=67 // pred_region
          %s1504 = smul.u32 2, %s35
          %1506 = vsyncadd %s1488, 0
          %s1507 = smul.addr %s1504, 2
          %s1508 = smul.addr %s1507, 8
          %s1509 = scalar_lea.hbm %s13, %s1508
          %s1510 = sshll.u32 %s1491, 4
          %s1511 = int_to_ptr.vmem [resolvable:$true] %s1510
          %s1512 = sshll.u32 %s1509, 4
          %s1513 = int_to_ptr.hbm [resolvable:$true] %s1512
          %1518 = dma.vmem_to_hbm [thread:$0]  %s1511, 512, %s1513, %s1488, 128, 128, 8
        $region80: #{tpu_custom_call.1} parent=67 // pred_fallthru
          _
        // Predicated region
        $region81: #{tpu_custom_call.1} parent=67 // pred_check
          %p1519 = pneg %p387
        $region82: #{tpu_custom_call.1} parent=67 // pred_check_branch
          %1521 = sbr.rel (%p1519) target = $region84
        $region83: #{tpu_custom_call.1} parent=67 // pred_region
          %s1522 = smul.u32 2, %s35
          %1524 = vsyncadd %s1493, 0
          %s1525 = scalar_lea.hbm %s14, %s1522
          %s1526 = sshll.u32 %s1496, 4
          %s1527 = int_to_ptr.vmem [resolvable:$true] %s1526
          %s1528 = sshll.u32 %s1525, 4
          %s1529 = int_to_ptr.hbm [resolvable:$true] %s1528
          %1534 = dma.vmem_to_hbm [thread:$0]  %s1527, 32, %s1529, %s1493, 16, 16, 1
        $region84: #{tpu_custom_call.1} parent=67 // pred_fallthru
          _
      $region68: #{tpu_custom_call.1} parent=5 // pred_fallthru
        _
      %p1535 = scmp.le.s32.totalorder 2, %s30
      // Predicated region
      $region85: #{tpu_custom_call.1} parent=5 // pred_check
        %p1536 = pneg %p1535
      $region86: #{tpu_custom_call.1} parent=5 // pred_check_branch
        %1538 = sbr.rel (%p1536) target = $region88
      $region87: #{tpu_custom_call.1} parent=5 // pred_region
        %s1539 = ssub.s32 %s30, 2
        // Predicated region
        $region89: #{tpu_custom_call.1} parent=87 // pred_check
          %p1540 = pneg %p341
        $region90: #{tpu_custom_call.1} parent=87 // pred_check_branch
          %1542 = sbr.rel (%p1540) target = $region92
        $region91: #{tpu_custom_call.1} parent=87 // pred_region
          %s1543 = smul.u32 2, %s36
          %p1544 = scmp.lt.s32.totalorder %s1543, 3
          %s1545 = scalar_select %p1544, %s1543, 3
          %s1546 = scalar_lea.vmem %s12, %s1545
        $region92: #{tpu_custom_call.1} parent=87 // pred_fallthru
          _
        // Predicated region
        $region93: #{tpu_custom_call.1} parent=87 // pred_check
          %p1547 = pneg %p367
        $region94: #{tpu_custom_call.1} parent=87 // pred_check_branch
          %1549 = sbr.rel (%p1547) target = $region96
        $region95: #{tpu_custom_call.1} parent=87 // pred_region
          %s1550 = sand.u32 %s352, 1
          %s1551 = scalar_lea.sflag [#allocation6], %s1550
          %s1552 = sand.u32 %s352, 1
          %s1553 = smul.addr %s1552, 32
          %s1554 = scalar_lea.vmem [#allocation7], %s1553
          %1556 = dma.done %s1551, 512
        $region96: #{tpu_custom_call.1} parent=87 // pred_fallthru
          _
        // Predicated region
        $region97: #{tpu_custom_call.1} parent=87 // pred_check
          %p1557 = pneg %p393
        $region98: #{tpu_custom_call.1} parent=87 // pred_check_branch
          %1559 = sbr.rel (%p1557) target = $region100
        $region99: #{tpu_custom_call.1} parent=87 // pred_region
          %s1560 = sand.u32 %s378, 1
          %s1561 = scalar_lea.sflag [#allocation9], %s1560
          %s1562 = sand.u32 %s378, 1
          %s1563 = smul.addr %s1562, 2
          %s1564 = scalar_lea.vmem [#allocation8], %s1563
          %1566 = dma.done %s1561, 32
        $region100: #{tpu_custom_call.1} parent=87 // pred_fallthru
          _
      $region88: #{tpu_custom_call.1} parent=5 // pred_fallthru
        _
    $region6: #{tpu_custom_call.1} parent=1 // loop_footer
      %s34 = sadd.s32 1, %s30
    $region7: #{tpu_custom_call.1} parent=1 // loop_footer_branch
      %29 = sbr.rel target = $region3
    $region8: #{tpu_custom_call.1} parent=1 // loop_exit
      _
    %1567 = vsyncpa [#allocation5], 1
    %s1568 = scalar_lea.sflag [#allocation5], 1
    %1569 = vsyncpa %s1568, 1
    %1570 = vsyncpa [#allocation6], 1
    %s1571 = scalar_lea.sflag [#allocation6], 1
    %1572 = vsyncpa %s1571, 1
    %1573 = vsyncpa [#allocation9], 1
    %s1574 = scalar_lea.sflag [#allocation9], 1
    %1575 = vsyncpa %s1574, 1

</llo_original>
